<compile_context>
chip_gen: v7x
topology: tpu7x:2x2x1
jax: 0.10.0
libtpu: 0.0.40
codegen_flags: <defaults>
</compile_context>

<pallas_src>
import jax
import jax.numpy as jnp
from jax import lax
from jax.experimental import pallas as pl
from jax.experimental.pallas import tpu as pltpu


# ----------------------------------------------------------------------------- kernel
def _lstm_fc_softmax_kernel(x_ref, wih_ref, whh_ref, b_ref, wfc_ref, bfc_ref,
                            out_ref, gx_ref):
    # x_ref   : (1, T*Bblk, D)  mm_dtype  time-major rows within this batch block
    # wih_ref : (D, 4*Hp)       mm_dtype  resident (single-buffered)
    # whh_ref : (Hp, 4*Hp)      mm_dtype  resident (single-buffered)
    # b_ref   : (1, 4*Hp)       f32       b_ih + b_hh, gate-padded, gate order (i,f,o,g)
    # wfc_ref : (Hp, Op)        mm_dtype  resident
    # bfc_ref : (1, Op)         f32       padded logit lanes carry -1e30
    # out_ref : (Bblk, Op)      f32
    # gx_ref  : (T*Bblk, 4*Hp)  mm_dtype VMEM scratch (hoisted input projection, no bias)
    bblk = out_ref.shape[0]
    T = x_ref.shape[1] // bblk
    Hp = whh_ref.shape[0]
    mm_dtype = whh_ref.dtype

    # ---- hoisted input projection: one big MXU matmul for all T timesteps ----
    gx_ref[...] = jnp.dot(x_ref[0], wih_ref[...],
                          preferred_element_type=jnp.float32).astype(mm_dtype)

    bias = b_ref[...]                                   # (1, 4*Hp) f32, loop-invariant

    # ---- sequential LSTM recurrence (only h @ W_hh is order-dependent) ----
    def step(t, carry):
        h, c = carry
        row0 = pl.multiple_of(t * bblk, bblk)           # tile-aligned slice start
        g_x = gx_ref[pl.ds(row0, bblk), :].astype(jnp.float32)
        gates = g_x + bias + jnp.dot(h.astype(mm_dtype), whh_ref[...],
                                     preferred_element_type=jnp.float32)
        # Gate layout (wrapper-permuted) is (i, f, o, g): the three sigmoid gates are
        # lane-contiguous -> one sigmoid + one tanh EUP launch per step.
        sig = jax.nn.sigmoid(gates[:, : 3 * Hp])
        i_g = sig[:, 0 * Hp:1 * Hp]
        f_g = sig[:, 1 * Hp:2 * Hp]
        o_g = sig[:, 2 * Hp:3 * Hp]
        g_g = jnp.tanh(gates[:, 3 * Hp:])
        c_new = f_g * c + i_g * g_g                     # elementwise math stays f32
        h_new = o_g * jnp.tanh(c_new)
        return h_new, c_new

    h0 = jnp.zeros((bblk, Hp), jnp.float32)             # h0 = c0 = 0 as in forward()
    c0 = jnp.zeros((bblk, Hp), jnp.float32)
    unroll = True if T <= 16 else 8                     # partial unroll for long T
    h_last, _ = lax.fori_loop(0, T, step, (h0, c0), unroll=unroll)

    # ---- FC on last timestep + softmax(dim=1), lane-dense (Op = multiple of 128) ----
    logits = (jnp.dot(h_last.astype(mm_dtype), wfc_ref[...],
                      preferred_element_type=jnp.float32) + bfc_ref[...])
    m = jnp.max(logits, axis=1, keepdims=True)
    e = jnp.exp(logits - m)                             # padded lanes: exp(~-1e30) == 0
    out_ref[...] = e / jnp.sum(e, axis=1, keepdims=True)


# ----------------------------------------------------------------------------- wrapper
def _round_up(n, m):
    return ((n + m - 1) // m) * m


def _block_vmem_bytes(b, T, D, Hp, Op, mm_it):
    """Per-batch-block VMEM footprint of the pallas_call (bytes)."""
    x_blk = 2 * T * b * D * mm_it                       # input block, double-buffered
    gx = T * b * 4 * Hp * mm_it                         # hoisted-projection scratch
    weights = (D * 4 * Hp + Hp * 4 * Hp + Hp * Op) * mm_it   # resident, single-buffered
    biases = (4 * Hp + Op) * 4                          # f32 biases
    out_blk = 2 * b * Op * 4                            # output block, double-buffered
    return x_blk + gx + weights + biases + out_blk


def _choose_b_block(Bp, bgran, T, D, Hp, Op, mm_it, budget):
    cands = [b for b in range(bgran, min(Bp, 256) + 1, bgran) if Bp % b == 0]
    # Prefer >= 2 batch blocks so the "parallel" axis can shard across v7x's 2 TCs.
    if Bp // bgran >= 2:
        multi = [b for b in cands if Bp // b >= 2]
        if multi:
            cands = multi
    fitting = [b for b in cands if _block_vmem_bytes(b, T, D, Hp, Op, mm_it) <= budget]
    return max(fitting) if fitting else min(cands)


def _resident_spec(shape):
    """Constant-index (grid-invariant) block: single-buffered when supported."""
    index_map = lambda i: (0,) * len(shape)
    try:
        return pl.BlockSpec(shape, index_map, pipeline_mode=pl.Buffered(1))
    except Exception:   # older Pallas without pipeline_mode / Buffered(1): default 2-buf
        return pl.BlockSpec(shape, index_map)


def lstm_model_forward(x, w_ih, w_hh, b_ih, b_hh, w_fc, b_fc,
                       *, mm_dtype=jnp.bfloat16, b_block=None):
    """x: (B, T, D), batch_first like nn.LSTM. Weights in PyTorch shapes:
       w_ih (4H, D), w_hh (4H, H), b_ih/b_hh (4H,), w_fc (O, H), b_fc (O,).
       mm_dtype: dtype of matmul operands (bf16 default, f32 supported); accumulation,
       biases, activations and the h/c state always stay float32."""
    B, T, D = x.shape
    H = w_hh.shape[1]
    O = w_fc.shape[0]
    f32 = jnp.float32
    mm_it = jnp.dtype(mm_dtype).itemsize

    # Batch-block granularity: 8 sublanes for f32, 16 for 16-bit (packed-tile aligned
    # dynamic slices of the mm_dtype gx scratch inside the recurrence).
    bgran = 8 if mm_it == 4 else 16
    Bp = _round_up(B, bgran)
    Hp = _round_up(H, 128)          # per-gate lane alignment
    Op = _round_up(O, 128)          # lane-dense output stores

    VMEM_BUDGET = 44 * 1024 * 1024  # safe under v7x's 64 MiB physical VMEM
    if b_block is None:
        b_block = _choose_b_block(Bp, bgran, T, D, Hp, Op, mm_it, VMEM_BUDGET)
    assert b_block % bgran == 0 and Bp % b_block == 0
    n_blocks = Bp // b_block
    footprint = _block_vmem_bytes(b_block, T, D, Hp, Op, mm_it)
    vmem_limit = int(min(max(footprint * 5 // 4 + (2 << 20), 32 << 20), 96 << 20))
    # TODO(synk): for very long T at minimum b_block, chunk the hoisted projection over
    # time (Tc-step scratch) instead of holding all T*b_block rows in VMEM.

    # --- x: cast to mm_dtype first, pad batch, group into blocks, time-major rows ---
    x_p = jnp.zeros((Bp, T, D), mm_dtype).at[:B].set(x.astype(mm_dtype))
    x_p = x_p.reshape(n_blocks, b_block, T, D).transpose(0, 2, 1, 3)
    x_p = x_p.reshape(n_blocks, T * b_block, D)

    # --- gate-padded weights; gate order permuted PyTorch (i,f,g,o) -> kernel (i,f,o,g)
    SRC_FOR_DST = (0, 1, 3, 2)      # dst block k takes PyTorch gate SRC_FOR_DST[k]

    def pad_gate_cols(w):           # (rows, 4H) f32 -> (rows, 4*Hp), zero padding
        padded = jnp.zeros((w.shape[0], 4 * Hp), f32)
        for dst, src in enumerate(SRC_FOR_DST):
            padded = padded.at[:, dst * Hp:dst * Hp + H].set(w[:, src * H:(src + 1) * H])
        return padded

    wih_p = pad_gate_cols(w_ih.T.astype(f32)).astype(mm_dtype)                # (D, 4Hp)
    whh_p = jnp.zeros((Hp, 4 * Hp), f32).at[:H].set(
        pad_gate_cols(w_hh.T.astype(f32))).astype(mm_dtype)                   # (Hp, 4Hp)
    b_p = pad_gate_cols((b_ih + b_hh).astype(f32).reshape(1, 4 * H))          # (1, 4Hp) f32
    wfc_p = jnp.zeros((Hp, Op), f32).at[:H, :O].set(
        w_fc.T.astype(f32)).astype(mm_dtype)                                  # (Hp, Op)
    bfc_p = jnp.full((1, Op), -1e30, f32).at[0, :O].set(b_fc.astype(f32))     # (1, Op) f32

    # Advisory cost estimate so XLA schedules the surrounding regroup/cast ops sensibly.
    flops = (2 * T * Bp * D * 4 * Hp          # hoisted input projection
             + 2 * T * Bp * Hp * 4 * Hp       # recurrent h @ W_hh
             + 2 * Bp * Hp * Op)              # final fc
    transcendentals = 5 * T * Bp * Hp + Bp * Op
    bytes_accessed = sum(int(a.size) * a.dtype.itemsize
                         for a in (x_p, wih_p, whh_p, b_p, wfc_p, bfc_p)) + Bp * Op * 4

    out_p = pl.pallas_call(
        _lstm_fc_softmax_kernel,
        out_shape=jax.ShapeDtypeStruct((Bp, Op), f32),
        grid=(n_blocks,),
        in_specs=[
            pl.BlockSpec((1, T * b_block, D), lambda i: (i, 0, 0)),   # x, one batch block
            _resident_spec((D, 4 * Hp)),                              # W_ih^T
            _resident_spec((Hp, 4 * Hp)),                             # W_hh^T
            _resident_spec((1, 4 * Hp)),                              # summed LSTM bias
            _resident_spec((Hp, Op)),                                 # W_fc^T
            _resident_spec((1, Op)),                                  # fc bias (-1e30 pad)
        ],
        out_specs=pl.BlockSpec((b_block, Op), lambda i: (i, 0)),
        scratch_shapes=[pltpu.VMEM((T * b_block, 4 * Hp), mm_dtype)], # hoisted x-gates
        compiler_params=pltpu.CompilerParams(
            dimension_semantics=("parallel",),       # batch blocks independent (megacore)
            vmem_limit_bytes=vmem_limit),
        cost_estimate=pl.CostEstimate(flops=flops,
                                      transcendentals=transcendentals,
                                      bytes_accessed=bytes_accessed),
    )(x_p, wih_p, whh_p, b_p, wfc_p, bfc_p)

    return out_p[:B, :O]


# ----------------------------------------------------------------------------- reference
def _reference_forward(x, w_ih, w_hh, b_ih, b_hh, w_fc, b_fc,
                       mm_dtype=jnp.float32):
    """Pure-JAX reference of the same forward pass. Models the kernel's quantization
       points exactly (matmul operands and the stored input projection in mm_dtype;
       f32 accumulation, bias, activations, state). Identity for mm_dtype=f32."""
    q = lambda a: a.astype(mm_dtype).astype(jnp.float32)
    H = w_hh.shape[1]
    B = x.shape[0]
    wih, whh, wfc = q(w_ih), q(w_hh), q(w_fc)
    b = (b_ih + b_hh).astype(jnp.float32)
    h = jnp.zeros((B, H), jnp.float32)
    c = jnp.zeros((B, H), jnp.float32)

    def step(carry, x_t):
        h, c = carry
        gx = q(q(x_t) @ wih.T)                  # kernel stores the projection in mm_dtype
        gates = gx + q(h) @ whh.T + b
        i = jax.nn.sigmoid(gates[:, 0 * H:1 * H])
        f = jax.nn.sigmoid(gates[:, 1 * H:2 * H])
        g = jnp.tanh(gates[:, 2 * H:3 * H])
        o = jax.nn.sigmoid(gates[:, 3 * H:4 * H])
        c = f * c + i * g
        h = o * jnp.tanh(c)
        return (h, c), None

    (h, c), _ = lax.scan(step, (h, c),
                         jnp.transpose(x.astype(jnp.float32), (1, 0, 2)))
    logits = q(h) @ wfc.T + b_fc.astype(jnp.float32)
    return jax.nn.softmax(logits, axis=1)


if __name__ == "__main__":
    # Small shapes consistent with the module (input_dim/hidden_dim scaled down, O=5).
    B, T, D, H, O = 2, 8, 16, 32, 5

    key = jax.random.PRNGKey(0)
    ks = jax.random.split(key, 7)
    scale = 0.1
    x = jax.random.normal(ks[0], (B, T, D), jnp.float32)
    w_ih = scale * jax.random.normal(ks[1], (4 * H, D), jnp.float32)
    w_hh = scale * jax.random.normal(ks[2], (4 * H, H), jnp.float32)
    b_ih = scale * jax.random.normal(ks[3], (4 * H,), jnp.float32)
    b_hh = scale * jax.random.normal(ks[4], (4 * H,), jnp.float32)
    w_fc = scale * jax.random.normal(ks[5], (O, H), jnp.float32)
    b_fc = scale * jax.random.normal(ks[6], (O,), jnp.float32)
    args = (x, w_ih, w_hh, b_ih, b_hh, w_fc, b_fc)

    # float32 matmul-operand path: exact semantics of the PyTorch module.
    out_f32 = jax.block_until_ready(lstm_model_forward(*args, mm_dtype=jnp.float32))
    ref_f32 = _reference_forward(*args, mm_dtype=jnp.float32)
    assert out_f32.shape == (B, O)
    assert bool(jnp.allclose(out_f32, ref_f32, atol=2e-4, rtol=2e-4)), \
        "f32 mismatch vs reference"

    # Default bfloat16 matmul-operand path (f32 accumulation / bias / activations / state).
    out_bf = jax.block_until_ready(lstm_model_forward(*args))
    ref_bf = _reference_forward(*args, mm_dtype=jnp.bfloat16)
    assert out_bf.shape == (B, O)
    assert bool(jnp.allclose(out_bf, ref_bf, atol=1e-3, rtol=1e-3)), \
        "bf16 mismatch vs reference"

    print("KERNEL_OK")
</pallas_src>

<mosaic_0001>
module attributes {stable_mosaic.version = 11 : i64} {
  func.func @_lstm_fc_softmax_kernel(%arg0: i32, %arg1: memref<1x64x16xf32, #tpu.memory_space<vmem>>, %arg2: memref<16x512xf32, #tpu.memory_space<vmem>>, %arg3: memref<128x512xf32, #tpu.memory_space<vmem>>, %arg4: memref<1x512xf32, #tpu.memory_space<vmem>>, %arg5: memref<128x128xf32, #tpu.memory_space<vmem>>, %arg6: memref<1x128xf32, #tpu.memory_space<vmem>>, %arg7: memref<8x128xf32, #tpu.memory_space<vmem>>, %arg8: memref<64x512xf32, #tpu.memory_space<vmem>>) attributes {dimension_semantics = [#tpu.dimension_semantics<parallel>], iteration_bounds = array<i64: 1>, scalar_prefetch = 0 : i64, scratch_operands = 1 : i64, tpu.core_type = #tpu.core_type<tc>, window_params = [{transform_indices = @transform_0, window_bounds = array<i64: 1, 64, 16>}, {pipeline_mode = #tpu.pipeline_mode<synchronous>, transform_indices = @transform_1, window_bounds = array<i64: 16, 512>}, {pipeline_mode = #tpu.pipeline_mode<synchronous>, transform_indices = @transform_2, window_bounds = array<i64: 128, 512>}, {pipeline_mode = #tpu.pipeline_mode<synchronous>, transform_indices = @transform_3, window_bounds = array<i64: 1, 512>}, {pipeline_mode = #tpu.pipeline_mode<synchronous>, transform_indices = @transform_4, window_bounds = array<i64: 128, 128>}, {pipeline_mode = #tpu.pipeline_mode<synchronous>, transform_indices = @transform_5, window_bounds = array<i64: 1, 128>}, {transform_indices = @transform_6, window_bounds = array<i64: 8, 128>}]} {
    %c0 = arith.constant 0 : index
    %c0_0 = arith.constant 0 : index
    %c0_1 = arith.constant 0 : index
    %0 = vector.load %arg1[%c0, %c0_0, %c0_1] : memref<1x64x16xf32, #tpu.memory_space<vmem>>, vector<1x64x16xf32>
    %1 = vector.shape_cast %0 : vector<1x64x16xf32> to vector<64x16xf32>
    %c0_2 = arith.constant 0 : index
    %c0_3 = arith.constant 0 : index
    %2 = vector.load %arg2[%c0_2, %c0_3] : memref<16x512xf32, #tpu.memory_space<vmem>>, vector<16x512xf32>
    %cst = arith.constant dense<0.000000e+00> : vector<64x512xf32>
    %3 = tpu.matmul %1, %2, %cst {dimension_numbers = #tpu.dot_dimension_numbers<[1], [0], [0], [1], [0, 0, 1, 1], [], []>} : vector<64x16xf32>, vector<16x512xf32>, vector<64x512xf32> -> vector<64x512xf32>
    %c0_4 = arith.constant 0 : index
    %c0_5 = arith.constant 0 : index
    %4 = vector.load %arg8[%c0_4, %c0_5] : memref<64x512xf32, #tpu.memory_space<vmem>>, vector<64x512xf32>
    tpu.vector_store %arg8[%c0_4, %c0_5], %3 {strides = array<i32>} : memref<64x512xf32, #tpu.memory_space<vmem>>, vector<64x512xf32>,
    %c0_6 = arith.constant 0 : index
    %c0_7 = arith.constant 0 : index
    %5 = vector.load %arg4[%c0_6, %c0_7] : memref<1x512xf32, #tpu.memory_space<vmem>>, vector<1x512xf32>
    %cst_8 = arith.constant 0.000000e+00 : f32
    %6 = vector.broadcast %cst_8 : f32 to vector<8x128xf32>
    %cst_9 = arith.constant 0.000000e+00 : f32
    %7 = vector.broadcast %cst_9 : f32 to vector<8x128xf32>
    %c0_i32 = arith.constant 0 : i32
    %c8_i32 = arith.constant 8 : i32
    %8 = arith.muli %c0_i32, %c8_i32 : i32
    %9 = tpu.assume_multiple %8, 8 : i32
    %10 = arith.index_cast %9 : i32 to index
    %c0_10 = arith.constant 0 : index
    %11 = vector.load %arg8[%10, %c0_10] : memref<64x512xf32, #tpu.memory_space<vmem>>, vector<8x512xf32>
    %12 = vector.broadcast %5 : vector<1x512xf32> to vector<8x512xf32>
    %13 = arith.addf %11, %12 : vector<8x512xf32>
    %c0_11 = arith.constant 0 : index
    %c0_12 = arith.constant 0 : index
    %14 = vector.load %arg3[%c0_11, %c0_12] : memref<128x512xf32, #tpu.memory_space<vmem>>, vector<128x512xf32>
    %cst_13 = arith.constant dense<0.000000e+00> : vector<8x512xf32>
    %15 = tpu.matmul %6, %14, %cst_13 {dimension_numbers = #tpu.dot_dimension_numbers<[1], [0], [0], [1], [0, 0, 1, 1], [], []>} : vector<8x128xf32>, vector<128x512xf32>, vector<8x512xf32> -> vector<8x512xf32>
    %16 = arith.addf %13, %15 : vector<8x512xf32>
    %17 = vector.extract_strided_slice %16 {offsets = [0, 0], sizes = [8, 384], strides = [1, 1]} : vector<8x512xf32> to vector<8x384xf32>
    %18 = arith.negf %17 : vector<8x384xf32>
    %19 = math.exp %18 : vector<8x384xf32>
    %cst_14 = arith.constant 1.000000e+00 : f32
    %20 = vector.broadcast %cst_14 : f32 to vector<8x384xf32>
    %21 = arith.addf %20, %19 : vector<8x384xf32>
    %22 = arith.divf %20, %21 : vector<8x384xf32>
    %23 = vector.extract_strided_slice %22 {offsets = [0, 0], sizes = [8, 128], strides = [1, 1]} : vector<8x384xf32> to vector<8x128xf32>
    %24 = vector.extract_strided_slice %22 {offsets = [0, 128], sizes = [8, 128], strides = [1, 1]} : vector<8x384xf32> to vector<8x128xf32>
    %25 = vector.extract_strided_slice %22 {offsets = [0, 256], sizes = [8, 128], strides = [1, 1]} : vector<8x384xf32> to vector<8x128xf32>
    %26 = vector.extract_strided_slice %16 {offsets = [0, 384], sizes = [8, 128], strides = [1, 1]} : vector<8x512xf32> to vector<8x128xf32>
    %27 = math.tanh %26 : vector<8x128xf32>
    %28 = arith.mulf %24, %7 : vector<8x128xf32>
    %29 = arith.mulf %23, %27 : vector<8x128xf32>
    %30 = arith.addf %28, %29 : vector<8x128xf32>
    %31 = math.tanh %30 : vector<8x128xf32>
    %32 = arith.mulf %25, %31 : vector<8x128xf32>
    %c1_i32 = arith.constant 1 : i32
    %c8_i32_15 = arith.constant 8 : i32
    %33 = arith.muli %c1_i32, %c8_i32_15 : i32
    %34 = tpu.assume_multiple %33, 8 : i32
    %35 = arith.index_cast %34 : i32 to index
    %c0_16 = arith.constant 0 : index
    %36 = vector.load %arg8[%35, %c0_16] : memref<64x512xf32, #tpu.memory_space<vmem>>, vector<8x512xf32>
    %37 = vector.broadcast %5 : vector<1x512xf32> to vector<8x512xf32>
    %38 = arith.addf %36, %37 : vector<8x512xf32>
    %c0_17 = arith.constant 0 : index
    %c0_18 = arith.constant 0 : index
    %39 = vector.load %arg3[%c0_17, %c0_18] : memref<128x512xf32, #tpu.memory_space<vmem>>, vector<128x512xf32>
    %cst_19 = arith.constant dense<0.000000e+00> : vector<8x512xf32>
    %40 = tpu.matmul %32, %39, %cst_19 {dimension_numbers = #tpu.dot_dimension_numbers<[1], [0], [0], [1], [0, 0, 1, 1], [], []>} : vector<8x128xf32>, vector<128x512xf32>, vector<8x512xf32> -> vector<8x512xf32>
    %41 = arith.addf %38, %40 : vector<8x512xf32>
    %42 = vector.extract_strided_slice %41 {offsets = [0, 0], sizes = [8, 384], strides = [1, 1]} : vector<8x512xf32> to vector<8x384xf32>
    %43 = arith.negf %42 : vector<8x384xf32>
    %44 = math.exp %43 : vector<8x384xf32>
    %cst_20 = arith.constant 1.000000e+00 : f32
    %45 = vector.broadcast %cst_20 : f32 to vector<8x384xf32>
    %46 = arith.addf %45, %44 : vector<8x384xf32>
    %47 = arith.divf %45, %46 : vector<8x384xf32>
    %48 = vector.extract_strided_slice %47 {offsets = [0, 0], sizes = [8, 128], strides = [1, 1]} : vector<8x384xf32> to vector<8x128xf32>
    %49 = vector.extract_strided_slice %47 {offsets = [0, 128], sizes = [8, 128], strides = [1, 1]} : vector<8x384xf32> to vector<8x128xf32>
    %50 = vector.extract_strided_slice %47 {offsets = [0, 256], sizes = [8, 128], strides = [1, 1]} : vector<8x384xf32> to vector<8x128xf32>
    %51 = vector.extract_strided_slice %41 {offsets = [0, 384], sizes = [8, 128], strides = [1, 1]} : vector<8x512xf32> to vector<8x128xf32>
    %52 = math.tanh %51 : vector<8x128xf32>
    %53 = arith.mulf %49, %30 : vector<8x128xf32>
    %54 = arith.mulf %48, %52 : vector<8x128xf32>
    %55 = arith.addf %53, %54 : vector<8x128xf32>
    %56 = math.tanh %55 : vector<8x128xf32>
    %57 = arith.mulf %50, %56 : vector<8x128xf32>
    %c2_i32 = arith.constant 2 : i32
    %c8_i32_21 = arith.constant 8 : i32
    %58 = arith.muli %c2_i32, %c8_i32_21 : i32
    %59 = tpu.assume_multiple %58, 8 : i32
    %60 = arith.index_cast %59 : i32 to index
    %c0_22 = arith.constant 0 : index
    %61 = vector.load %arg8[%60, %c0_22] : memref<64x512xf32, #tpu.memory_space<vmem>>, vector<8x512xf32>
    %62 = vector.broadcast %5 : vector<1x512xf32> to vector<8x512xf32>
    %63 = arith.addf %61, %62 : vector<8x512xf32>
    %c0_23 = arith.constant 0 : index
    %c0_24 = arith.constant 0 : index
    %64 = vector.load %arg3[%c0_23, %c0_24] : memref<128x512xf32, #tpu.memory_space<vmem>>, vector<128x512xf32>
    %cst_25 = arith.constant dense<0.000000e+00> : vector<8x512xf32>
    %65 = tpu.matmul %57, %64, %cst_25 {dimension_numbers = #tpu.dot_dimension_numbers<[1], [0], [0], [1], [0, 0, 1, 1], [], []>} : vector<8x128xf32>, vector<128x512xf32>, vector<8x512xf32> -> vector<8x512xf32>
    %66 = arith.addf %63, %65 : vector<8x512xf32>
    %67 = vector.extract_strided_slice %66 {offsets = [0, 0], sizes = [8, 384], strides = [1, 1]} : vector<8x512xf32> to vector<8x384xf32>
    %68 = arith.negf %67 : vector<8x384xf32>
    %69 = math.exp %68 : vector<8x384xf32>
    %cst_26 = arith.constant 1.000000e+00 : f32
    %70 = vector.broadcast %cst_26 : f32 to vector<8x384xf32>
    %71 = arith.addf %70, %69 : vector<8x384xf32>
    %72 = arith.divf %70, %71 : vector<8x384xf32>
    %73 = vector.extract_strided_slice %72 {offsets = [0, 0], sizes = [8, 128], strides = [1, 1]} : vector<8x384xf32> to vector<8x128xf32>
    %74 = vector.extract_strided_slice %72 {offsets = [0, 128], sizes = [8, 128], strides = [1, 1]} : vector<8x384xf32> to vector<8x128xf32>
    %75 = vector.extract_strided_slice %72 {offsets = [0, 256], sizes = [8, 128], strides = [1, 1]} : vector<8x384xf32> to vector<8x128xf32>
    %76 = vector.extract_strided_slice %66 {offsets = [0, 384], sizes = [8, 128], strides = [1, 1]} : vector<8x512xf32> to vector<8x128xf32>
    %77 = math.tanh %76 : vector<8x128xf32>
    %78 = arith.mulf %74, %55 : vector<8x128xf32>
    %79 = arith.mulf %73, %77 : vector<8x128xf32>
    %80 = arith.addf %78, %79 : vector<8x128xf32>
    %81 = math.tanh %80 : vector<8x128xf32>
    %82 = arith.mulf %75, %81 : vector<8x128xf32>
    %c3_i32 = arith.constant 3 : i32
    %c8_i32_27 = arith.constant 8 : i32
    %83 = arith.muli %c3_i32, %c8_i32_27 : i32
    %84 = tpu.assume_multiple %83, 8 : i32
    %85 = arith.index_cast %84 : i32 to index
    %c0_28 = arith.constant 0 : index
    %86 = vector.load %arg8[%85, %c0_28] : memref<64x512xf32, #tpu.memory_space<vmem>>, vector<8x512xf32>
    %87 = vector.broadcast %5 : vector<1x512xf32> to vector<8x512xf32>
    %88 = arith.addf %86, %87 : vector<8x512xf32>
    %c0_29 = arith.constant 0 : index
    %c0_30 = arith.constant 0 : index
    %89 = vector.load %arg3[%c0_29, %c0_30] : memref<128x512xf32, #tpu.memory_space<vmem>>, vector<128x512xf32>
    %cst_31 = arith.constant dense<0.000000e+00> : vector<8x512xf32>
    %90 = tpu.matmul %82, %89, %cst_31 {dimension_numbers = #tpu.dot_dimension_numbers<[1], [0], [0], [1], [0, 0, 1, 1], [], []>} : vector<8x128xf32>, vector<128x512xf32>, vector<8x512xf32> -> vector<8x512xf32>
    %91 = arith.addf %88, %90 : vector<8x512xf32>
    %92 = vector.extract_strided_slice %91 {offsets = [0, 0], sizes = [8, 384], strides = [1, 1]} : vector<8x512xf32> to vector<8x384xf32>
    %93 = arith.negf %92 : vector<8x384xf32>
    %94 = math.exp %93 : vector<8x384xf32>
    %cst_32 = arith.constant 1.000000e+00 : f32
    %95 = vector.broadcast %cst_32 : f32 to vector<8x384xf32>
    %96 = arith.addf %95, %94 : vector<8x384xf32>
    %97 = arith.divf %95, %96 : vector<8x384xf32>
    %98 = vector.extract_strided_slice %97 {offsets = [0, 0], sizes = [8, 128], strides = [1, 1]} : vector<8x384xf32> to vector<8x128xf32>
    %99 = vector.extract_strided_slice %97 {offsets = [0, 128], sizes = [8, 128], strides = [1, 1]} : vector<8x384xf32> to vector<8x128xf32>
    %100 = vector.extract_strided_slice %97 {offsets = [0, 256], sizes = [8, 128], strides = [1, 1]} : vector<8x384xf32> to vector<8x128xf32>
    %101 = vector.extract_strided_slice %91 {offsets = [0, 384], sizes = [8, 128], strides = [1, 1]} : vector<8x512xf32> to vector<8x128xf32>
    %102 = math.tanh %101 : vector<8x128xf32>
    %103 = arith.mulf %99, %80 : vector<8x128xf32>
    %104 = arith.mulf %98, %102 : vector<8x128xf32>
    %105 = arith.addf %103, %104 : vector<8x128xf32>
    %106 = math.tanh %105 : vector<8x128xf32>
    %107 = arith.mulf %100, %106 : vector<8x128xf32>
    %c4_i32 = arith.constant 4 : i32
    %c8_i32_33 = arith.constant 8 : i32
    %108 = arith.muli %c4_i32, %c8_i32_33 : i32
    %109 = tpu.assume_multiple %108, 8 : i32
    %110 = arith.index_cast %109 : i32 to index
    %c0_34 = arith.constant 0 : index
    %111 = vector.load %arg8[%110, %c0_34] : memref<64x512xf32, #tpu.memory_space<vmem>>, vector<8x512xf32>
    %112 = vector.broadcast %5 : vector<1x512xf32> to vector<8x512xf32>
    %113 = arith.addf %111, %112 : vector<8x512xf32>
    %c0_35 = arith.constant 0 : index
    %c0_36 = arith.constant 0 : index
    %114 = vector.load %arg3[%c0_35, %c0_36] : memref<128x512xf32, #tpu.memory_space<vmem>>, vector<128x512xf32>
    %cst_37 = arith.constant dense<0.000000e+00> : vector<8x512xf32>
    %115 = tpu.matmul %107, %114, %cst_37 {dimension_numbers = #tpu.dot_dimension_numbers<[1], [0], [0], [1], [0, 0, 1, 1], [], []>} : vector<8x128xf32>, vector<128x512xf32>, vector<8x512xf32> -> vector<8x512xf32>
    %116 = arith.addf %113, %115 : vector<8x512xf32>
    %117 = vector.extract_strided_slice %116 {offsets = [0, 0], sizes = [8, 384], strides = [1, 1]} : vector<8x512xf32> to vector<8x384xf32>
    %118 = arith.negf %117 : vector<8x384xf32>
    %119 = math.exp %118 : vector<8x384xf32>
    %cst_38 = arith.constant 1.000000e+00 : f32
    %120 = vector.broadcast %cst_38 : f32 to vector<8x384xf32>
    %121 = arith.addf %120, %119 : vector<8x384xf32>
    %122 = arith.divf %120, %121 : vector<8x384xf32>
    %123 = vector.extract_strided_slice %122 {offsets = [0, 0], sizes = [8, 128], strides = [1, 1]} : vector<8x384xf32> to vector<8x128xf32>
    %124 = vector.extract_strided_slice %122 {offsets = [0, 128], sizes = [8, 128], strides = [1, 1]} : vector<8x384xf32> to vector<8x128xf32>
    %125 = vector.extract_strided_slice %122 {offsets = [0, 256], sizes = [8, 128], strides = [1, 1]} : vector<8x384xf32> to vector<8x128xf32>
    %126 = vector.extract_strided_slice %116 {offsets = [0, 384], sizes = [8, 128], strides = [1, 1]} : vector<8x512xf32> to vector<8x128xf32>
    %127 = math.tanh %126 : vector<8x128xf32>
    %128 = arith.mulf %124, %105 : vector<8x128xf32>
    %129 = arith.mulf %123, %127 : vector<8x128xf32>
    %130 = arith.addf %128, %129 : vector<8x128xf32>
    %131 = math.tanh %130 : vector<8x128xf32>
    %132 = arith.mulf %125, %131 : vector<8x128xf32>
    %c5_i32 = arith.constant 5 : i32
    %c8_i32_39 = arith.constant 8 : i32
    %133 = arith.muli %c5_i32, %c8_i32_39 : i32
    %134 = tpu.assume_multiple %133, 8 : i32
    %135 = arith.index_cast %134 : i32 to index
    %c0_40 = arith.constant 0 : index
    %136 = vector.load %arg8[%135, %c0_40] : memref<64x512xf32, #tpu.memory_space<vmem>>, vector<8x512xf32>
    %137 = vector.broadcast %5 : vector<1x512xf32> to vector<8x512xf32>
    %138 = arith.addf %136, %137 : vector<8x512xf32>
    %c0_41 = arith.constant 0 : index
    %c0_42 = arith.constant 0 : index
    %139 = vector.load %arg3[%c0_41, %c0_42] : memref<128x512xf32, #tpu.memory_space<vmem>>, vector<128x512xf32>
    %cst_43 = arith.constant dense<0.000000e+00> : vector<8x512xf32>
    %140 = tpu.matmul %132, %139, %cst_43 {dimension_numbers = #tpu.dot_dimension_numbers<[1], [0], [0], [1], [0, 0, 1, 1], [], []>} : vector<8x128xf32>, vector<128x512xf32>, vector<8x512xf32> -> vector<8x512xf32>
    %141 = arith.addf %138, %140 : vector<8x512xf32>
    %142 = vector.extract_strided_slice %141 {offsets = [0, 0], sizes = [8, 384], strides = [1, 1]} : vector<8x512xf32> to vector<8x384xf32>
    %143 = arith.negf %142 : vector<8x384xf32>
    %144 = math.exp %143 : vector<8x384xf32>
    %cst_44 = arith.constant 1.000000e+00 : f32
    %145 = vector.broadcast %cst_44 : f32 to vector<8x384xf32>
    %146 = arith.addf %145, %144 : vector<8x384xf32>
    %147 = arith.divf %145, %146 : vector<8x384xf32>
    %148 = vector.extract_strided_slice %147 {offsets = [0, 0], sizes = [8, 128], strides = [1, 1]} : vector<8x384xf32> to vector<8x128xf32>
    %149 = vector.extract_strided_slice %147 {offsets = [0, 128], sizes = [8, 128], strides = [1, 1]} : vector<8x384xf32> to vector<8x128xf32>
    %150 = vector.extract_strided_slice %147 {offsets = [0, 256], sizes = [8, 128], strides = [1, 1]} : vector<8x384xf32> to vector<8x128xf32>
    %151 = vector.extract_strided_slice %141 {offsets = [0, 384], sizes = [8, 128], strides = [1, 1]} : vector<8x512xf32> to vector<8x128xf32>
    %152 = math.tanh %151 : vector<8x128xf32>
    %153 = arith.mulf %149, %130 : vector<8x128xf32>
    %154 = arith.mulf %148, %152 : vector<8x128xf32>
    %155 = arith.addf %153, %154 : vector<8x128xf32>
    %156 = math.tanh %155 : vector<8x128xf32>
    %157 = arith.mulf %150, %156 : vector<8x128xf32>
    %c6_i32 = arith.constant 6 : i32
    %c8_i32_45 = arith.constant 8 : i32
    %158 = arith.muli %c6_i32, %c8_i32_45 : i32
    %159 = tpu.assume_multiple %158, 8 : i32
    %160 = arith.index_cast %159 : i32 to index
    %c0_46 = arith.constant 0 : index
    %161 = vector.load %arg8[%160, %c0_46] : memref<64x512xf32, #tpu.memory_space<vmem>>, vector<8x512xf32>
    %162 = vector.broadcast %5 : vector<1x512xf32> to vector<8x512xf32>
    %163 = arith.addf %161, %162 : vector<8x512xf32>
    %c0_47 = arith.constant 0 : index
    %c0_48 = arith.constant 0 : index
    %164 = vector.load %arg3[%c0_47, %c0_48] : memref<128x512xf32, #tpu.memory_space<vmem>>, vector<128x512xf32>
    %cst_49 = arith.constant dense<0.000000e+00> : vector<8x512xf32>
    %165 = tpu.matmul %157, %164, %cst_49 {dimension_numbers = #tpu.dot_dimension_numbers<[1], [0], [0], [1], [0, 0, 1, 1], [], []>} : vector<8x128xf32>, vector<128x512xf32>, vector<8x512xf32> -> vector<8x512xf32>
    %166 = arith.addf %163, %165 : vector<8x512xf32>
    %167 = vector.extract_strided_slice %166 {offsets = [0, 0], sizes = [8, 384], strides = [1, 1]} : vector<8x512xf32> to vector<8x384xf32>
    %168 = arith.negf %167 : vector<8x384xf32>
    %169 = math.exp %168 : vector<8x384xf32>
    %cst_50 = arith.constant 1.000000e+00 : f32
    %170 = vector.broadcast %cst_50 : f32 to vector<8x384xf32>
    %171 = arith.addf %170, %169 : vector<8x384xf32>
    %172 = arith.divf %170, %171 : vector<8x384xf32>
    %173 = vector.extract_strided_slice %172 {offsets = [0, 0], sizes = [8, 128], strides = [1, 1]} : vector<8x384xf32> to vector<8x128xf32>
    %174 = vector.extract_strided_slice %172 {offsets = [0, 128], sizes = [8, 128], strides = [1, 1]} : vector<8x384xf32> to vector<8x128xf32>
    %175 = vector.extract_strided_slice %172 {offsets = [0, 256], sizes = [8, 128], strides = [1, 1]} : vector<8x384xf32> to vector<8x128xf32>
    %176 = vector.extract_strided_slice %166 {offsets = [0, 384], sizes = [8, 128], strides = [1, 1]} : vector<8x512xf32> to vector<8x128xf32>
    %177 = math.tanh %176 : vector<8x128xf32>
    %178 = arith.mulf %174, %155 : vector<8x128xf32>
    %179 = arith.mulf %173, %177 : vector<8x128xf32>
    %180 = arith.addf %178, %179 : vector<8x128xf32>
    %181 = math.tanh %180 : vector<8x128xf32>
    %182 = arith.mulf %175, %181 : vector<8x128xf32>
    %c7_i32 = arith.constant 7 : i32
    %c8_i32_51 = arith.constant 8 : i32
    %183 = arith.muli %c7_i32, %c8_i32_51 : i32
    %184 = tpu.assume_multiple %183, 8 : i32
    %185 = arith.index_cast %184 : i32 to index
    %c0_52 = arith.constant 0 : index
    %186 = vector.load %arg8[%185, %c0_52] : memref<64x512xf32, #tpu.memory_space<vmem>>, vector<8x512xf32>
    %187 = vector.broadcast %5 : vector<1x512xf32> to vector<8x512xf32>
    %188 = arith.addf %186, %187 : vector<8x512xf32>
    %c0_53 = arith.constant 0 : index
    %c0_54 = arith.constant 0 : index
    %189 = vector.load %arg3[%c0_53, %c0_54] : memref<128x512xf32, #tpu.memory_space<vmem>>, vector<128x512xf32>
    %cst_55 = arith.constant dense<0.000000e+00> : vector<8x512xf32>
    %190 = tpu.matmul %182, %189, %cst_55 {dimension_numbers = #tpu.dot_dimension_numbers<[1], [0], [0], [1], [0, 0, 1, 1], [], []>} : vector<8x128xf32>, vector<128x512xf32>, vector<8x512xf32> -> vector<8x512xf32>
    %191 = arith.addf %188, %190 : vector<8x512xf32>
    %192 = vector.extract_strided_slice %191 {offsets = [0, 0], sizes = [8, 384], strides = [1, 1]} : vector<8x512xf32> to vector<8x384xf32>
    %193 = arith.negf %192 : vector<8x384xf32>
    %194 = math.exp %193 : vector<8x384xf32>
    %cst_56 = arith.constant 1.000000e+00 : f32
    %195 = vector.broadcast %cst_56 : f32 to vector<8x384xf32>
    %196 = arith.addf %195, %194 : vector<8x384xf32>
    %197 = arith.divf %195, %196 : vector<8x384xf32>
    %198 = vector.extract_strided_slice %197 {offsets = [0, 0], sizes = [8, 128], strides = [1, 1]} : vector<8x384xf32> to vector<8x128xf32>
    %199 = vector.extract_strided_slice %197 {offsets = [0, 128], sizes = [8, 128], strides = [1, 1]} : vector<8x384xf32> to vector<8x128xf32>
    %200 = vector.extract_strided_slice %197 {offsets = [0, 256], sizes = [8, 128], strides = [1, 1]} : vector<8x384xf32> to vector<8x128xf32>
    %201 = vector.extract_strided_slice %191 {offsets = [0, 384], sizes = [8, 128], strides = [1, 1]} : vector<8x512xf32> to vector<8x128xf32>
    %202 = math.tanh %201 : vector<8x128xf32>
    %203 = arith.mulf %199, %180 : vector<8x128xf32>
    %204 = arith.mulf %198, %202 : vector<8x128xf32>
    %205 = arith.addf %203, %204 : vector<8x128xf32>
    %206 = math.tanh %205 : vector<8x128xf32>
    %207 = arith.mulf %200, %206 : vector<8x128xf32>
    %c8_i32_57 = arith.constant 8 : i32
    %c0_58 = arith.constant 0 : index
    %c0_59 = arith.constant 0 : index
    %208 = vector.load %arg5[%c0_58, %c0_59] : memref<128x128xf32, #tpu.memory_space<vmem>>, vector<128x128xf32>
    %cst_60 = arith.constant dense<0.000000e+00> : vector<8x128xf32>
    %209 = tpu.matmul %207, %208, %cst_60 {dimension_numbers = #tpu.dot_dimension_numbers<[1], [0], [0], [1], [0, 0, 1, 1], [], []>} : vector<8x128xf32>, vector<128x128xf32>, vector<8x128xf32> -> vector<8x128xf32>
    %c0_61 = arith.constant 0 : index
    %c0_62 = arith.constant 0 : index
    %210 = vector.load %arg6[%c0_61, %c0_62] : memref<1x128xf32, #tpu.memory_space<vmem>>, vector<1x128xf32>
    %211 = vector.broadcast %210 : vector<1x128xf32> to vector<8x128xf32>
    %212 = arith.addf %209, %211 : vector<8x128xf32>
    %cst_63 = arith.constant dense<0xFF800000> : vector<8xf32>
    %213 = vector.multi_reduction <maximumf>, %212, %cst_63 [1] : vector<8x128xf32> to vector<8xf32>
    %214 = vector.shape_cast %213 : vector<8xf32> to vector<8x1xf32>
    %215 = vector.broadcast %214 : vector<8x1xf32> to vector<8x128xf32>
    %216 = arith.subf %212, %215 : vector<8x128xf32>
    %217 = math.exp %216 : vector<8x128xf32>
    %cst_64 = arith.constant dense<0.000000e+00> : vector<8xf32>
    %218 = vector.multi_reduction <add>, %217, %cst_64 [1] : vector<8x128xf32> to vector<8xf32>
    %219 = vector.shape_cast %218 : vector<8xf32> to vector<8x1xf32>
    %220 = vector.broadcast %219 : vector<8x1xf32> to vector<8x128xf32>
    %221 = arith.divf %217, %220 : vector<8x128xf32>
    %c0_65 = arith.constant 0 : index
    %c0_66 = arith.constant 0 : index
    %222 = vector.load %arg7[%c0_65, %c0_66] : memref<8x128xf32, #tpu.memory_space<vmem>>, vector<8x128xf32>
    tpu.vector_store %arg7[%c0_65, %c0_66], %221 {strides = array<i32>} : memref<8x128xf32, #tpu.memory_space<vmem>>, vector<8x128xf32>,
    return
  }
  func.func @transform_0(%arg0: i32) -> (i32, i32, i32) {
    %c0_i32 = arith.constant 0 : i32
    %c0_i32_0 = arith.constant 0 : i32
    %c0_i32_1 = arith.constant 0 : i32
    return %arg0, %c0_i32, %c0_i32_0 : i32, i32, i32
  }
  func.func @transform_1(%arg0: i32) -> (i32, i32) {
    %c0_i32 = arith.constant 0 : i32
    %c0_i32_0 = arith.constant 0 : i32
    %c0_i32_1 = arith.constant 0 : i32
    return %c0_i32, %c0_i32_0 : i32, i32
  }
  func.func @transform_2(%arg0: i32) -> (i32, i32) {
    %c0_i32 = arith.constant 0 : i32
    %c0_i32_0 = arith.constant 0 : i32
    %c0_i32_1 = arith.constant 0 : i32
    return %c0_i32, %c0_i32_0 : i32, i32
  }
  func.func @transform_3(%arg0: i32) -> (i32, i32) {
    %c0_i32 = arith.constant 0 : i32
    %c0_i32_0 = arith.constant 0 : i32
    %c0_i32_1 = arith.constant 0 : i32
    return %c0_i32, %c0_i32_0 : i32, i32
  }
  func.func @transform_4(%arg0: i32) -> (i32, i32) {
    %c0_i32 = arith.constant 0 : i32
    %c0_i32_0 = arith.constant 0 : i32
    %c0_i32_1 = arith.constant 0 : i32
    return %c0_i32, %c0_i32_0 : i32, i32
  }
  func.func @transform_5(%arg0: i32) -> (i32, i32) {
    %c0_i32 = arith.constant 0 : i32
    %c0_i32_0 = arith.constant 0 : i32
    %c0_i32_1 = arith.constant 0 : i32
    return %c0_i32, %c0_i32_0 : i32, i32
  }
  func.func @transform_6(%arg0: i32) -> (i32, i32) {
    %c0_i32 = arith.constant 0 : i32
    %c0_i32_0 = arith.constant 0 : i32
    return %arg0, %c0_i32 : i32, i32
  }
}

</mosaic_0001>

<llo_original>
// kernel: tpu_custom_call.1
$region0: #{tpu_custom_call.1}
  #allocation0 [shape = 'u32[]', space=smem, size = 0x4, offset = 0x4, fixed_abs, tag = 'smem constant byte address 0x4 - core index']
  #allocation1 [shape = 'u32[144,128]{1,0:T(1,128)}', space=vmem, size = 0x12000, scoped, tag = 'internal scratch']
  #allocation2 [shape = 'f32[64,512]{1,0:T(8,128)}', space=vmem, size = 0x20000, scoped, tag = 'scratch operand']
  %s0 = inlined_call_operand.vmem [shape: f32[1,64,16], index: 0, kind: input, shape index: {}]
  %s1 = inlined_call_operand.vmem [shape: f32[16,512], index: 1, kind: input, shape index: {}]
  %s2 = inlined_call_operand.hbm [shape: f32[128,512], index: 2, kind: input, shape index: {}]
  %s3 = inlined_call_operand.vmem [shape: f32[1,512], index: 3, kind: input, shape index: {}]
  %s4 = inlined_call_operand.hbm [shape: f32[128,128], index: 4, kind: input, shape index: {}]
  %s5 = inlined_call_operand.vmem [shape: f32[1,128], index: 5, kind: input, shape index: {}]
  %s6 = inlined_call_operand.hbm [shape: f32[8,128], index: 6, kind: output, shape index: {}]
  %s7 = sld [smem:[#allocation0]]
  $region42: #{tpu_custom_call.1} parent=0
    _
  %s9 = ssub.s32 1, %s7
  %s10 = scalar_select 0, %s9, %s7
  $region1: #{tpu_custom_call.1} parent=0
    #allocation3 [shape = 'u8[262144]{0}', space=vmem, size = 0x40000, scoped, tag = 'input window, operand 2, single buffered']
    #allocation4 [shape = 's32[1]{0}', space=sflag, size = 0x4, scoped, tag = 'scoped memory for tpu_custom_call.1']
    #allocation5 [shape = 's32[1]{0}', space=sflag, size = 0x4, scoped, tag = 'scoped memory for tpu_custom_call.1']
    #allocation6 [shape = 'u8[65536]{0}', space=vmem, size = 0x10000, scoped, tag = 'input window, operand 4, single buffered']
    #allocation7 [shape = 's32[1]{0}', space=sflag, size = 0x4, scoped, tag = 'scoped memory for tpu_custom_call.1']
    #allocation8 [shape = 'u8[4096]{0}', space=vmem, size = 0x1000, scoped, tag = 'output window, operand 0, single buffered']
    %11 = vsyncpa [#allocation4], 0
    %12 = vsyncpa [#allocation7], 0
    %13 = vsyncpa [#allocation5], 0
    // Predicated region
    $region2: #{tpu_custom_call.1} parent=1 // pred_check
      _
    $region3: #{tpu_custom_call.1} parent=1 // pred_check_branch
      %15 = sbr.rel (0) target = $region5
    $region4: #{tpu_custom_call.1} parent=1 // pred_region
      _
    $region5: #{tpu_custom_call.1} parent=1 // pred_fallthru
      _
    // Predicated region
    $region6: #{tpu_custom_call.1} parent=1 // pred_check
      _
    $region7: #{tpu_custom_call.1} parent=1 // pred_check_branch
      %17 = sbr.rel (0) target = $region9
    $region8: #{tpu_custom_call.1} parent=1 // pred_region
      _
    $region9: #{tpu_custom_call.1} parent=1 // pred_fallthru
      _
    // Predicated region
    $region10: #{tpu_custom_call.1} parent=1 // pred_check
      _
    $region11: #{tpu_custom_call.1} parent=1 // pred_check_branch
      %19 = sbr.rel (0) target = $region13
    $region12: #{tpu_custom_call.1} parent=1 // pred_region
      %s21 = ssub.s32 8192, 8192
      %22 = vsyncadd [#allocation4], %s21
      %s23 = sshll.u32 [#allocation3], 4
      %s24 = int_to_ptr.vmem [resolvable:$true] %s23
      %29 = dma.hbm_to_vmem [thread:$0]  %s2, 8192, %s24, [#allocation4], 512, 512, 32
    $region13: #{tpu_custom_call.1} parent=1 // pred_fallthru
      _
    // Predicated region
    $region14: #{tpu_custom_call.1} parent=1 // pred_check
      _
    $region15: #{tpu_custom_call.1} parent=1 // pred_check_branch
      %31 = sbr.rel (0) target = $region17
    $region16: #{tpu_custom_call.1} parent=1 // pred_region
      _
    $region17: #{tpu_custom_call.1} parent=1 // pred_fallthru
      _
    // Predicated region
    $region18: #{tpu_custom_call.1} parent=1 // pred_check
      _
    $region19: #{tpu_custom_call.1} parent=1 // pred_check_branch
      %33 = sbr.rel (0) target = $region21
    $region20: #{tpu_custom_call.1} parent=1 // pred_region
      %s35 = ssub.s32 2048, 2048
      %36 = vsyncadd [#allocation7], %s35
      %s37 = sshll.u32 [#allocation6], 4
      %s38 = int_to_ptr.vmem [resolvable:$true] %s37
      %43 = dma.hbm_to_vmem [thread:$0]  %s4, 2048, %s38, [#allocation7], 128, 128, 8
    $region21: #{tpu_custom_call.1} parent=1 // pred_fallthru
      _
    // Predicated region
    $region22: #{tpu_custom_call.1} parent=1 // pred_check
      _
    $region23: #{tpu_custom_call.1} parent=1 // pred_check_branch
      %45 = sbr.rel (0) target = $region25
    $region24: #{tpu_custom_call.1} parent=1 // pred_region
      _
    $region25: #{tpu_custom_call.1} parent=1 // pred_fallthru
      _
    // Predicated region
    $region26: #{tpu_custom_call.1} parent=1 // pred_check
      _
    $region27: #{tpu_custom_call.1} parent=1 // pred_check_branch
      %47 = sbr.rel (0) target = $region29
    $region28: #{tpu_custom_call.1} parent=1 // pred_region
      %48 = dma.done [#allocation4], 8192
    $region29: #{tpu_custom_call.1} parent=1 // pred_fallthru
      _
    // Predicated region
    $region30: #{tpu_custom_call.1} parent=1 // pred_check
      _
    $region31: #{tpu_custom_call.1} parent=1 // pred_check_branch
      %50 = sbr.rel (0) target = $region33
    $region32: #{tpu_custom_call.1} parent=1 // pred_region
      %51 = dma.done [#allocation7], 2048
    $region33: #{tpu_custom_call.1} parent=1 // pred_fallthru
      _
    %v52 = vld [vmem:[%s0] sm:$0xff]
    %v53 = vld [vmem:[%s0 + $0x8] sm:$0xff]
    %v54 = vld [vmem:[%s0 + $0x10] sm:$0xff]
    %v55 = vld [vmem:[%s0 + $0x18] sm:$0xff]
    %v56 = vld [vmem:[%s0 + $0x20] sm:$0xff]
    %v57 = vld [vmem:[%s0 + $0x28] sm:$0xff]
    %v58 = vld [vmem:[%s0 + $0x30] sm:$0xff]
    %v59 = vld [vmem:[%s0 + $0x38] sm:$0xff]
    %v60 = vld [vmem:[%s1] sm:$0xff]
    %v61 = vld [vmem:[%s1 + $0x8] sm:$0xff]
    %v62 = vld [vmem:[%s1 + $0x10] sm:$0xff]
    %v63 = vld [vmem:[%s1 + $0x18] sm:$0xff]
    %v64 = vld [vmem:[%s1 + $0x20] sm:$0xff]
    %v65 = vld [vmem:[%s1 + $0x28] sm:$0xff]
    %v66 = vld [vmem:[%s1 + $0x30] sm:$0xff]
    %v67 = vld [vmem:[%s1 + $0x38] sm:$0xff]
    %vm68 = vcmask 130048
    %v70 = vsel %vm68, %v52, 0
    %v73 = vsel %vm68, %v53, 0
    %v76 = vsel %vm68, %v54, 0
    %v79 = vsel %vm68, %v55, 0
    %v82 = vsel %vm68, %v56, 0
    %v85 = vsel %vm68, %v57, 0
    %v88 = vsel %vm68, %v58, 0
    %v91 = vsel %vm68, %v59, 0
    %93 = vmatprep.subr.mxu0 %v61
    %94 = vmatpush1.msra.mxu0 %v60
    %95 = vmatprep.subr.mxu0 %v65
    %96 = vmatpush1.msra.mxu0 %v64
    %97 = vmatprep.subr.mxu0 0.0
    %98 = vmatpush1.msra.mxu0 0.0
    %99 = vmatprep.subr.mxu0 0.0
    %100 = vmatpush1.msra.mxu0 0.0
    %101 = vmatprep.subr.mxu0 0.0
    %102 = vmatpush1.msra.mxu0 0.0
    %103 = vmatprep.subr.mxu0 0.0
    %104 = vmatpush1.msra.mxu0 0.0
    %105 = vmatprep.subr.mxu0 0.0
    %106 = vmatpush1.msra.mxu0 0.0
    %107 = vmatprep.subr.mxu0 0.0
    %108 = vmatpush1.msra.mxu0 0.0
    %109 = vmatprep.subr.mxu0 0.0
    %110 = vmatpush1.msra.mxu0 0.0
    %111 = vmatprep.subr.mxu0 0.0
    %112 = vmatpush1.msra.mxu0 0.0
    %113 = vmatprep.subr.mxu0 0.0
    %114 = vmatpush1.msra.mxu0 0.0
    %115 = vmatprep.subr.mxu0 0.0
    %116 = vmatpush1.msra.mxu0 0.0
    %117 = vmatprep.subr.mxu0 0.0
    %118 = vmatpush1.msra.mxu0 0.0
    %119 = vmatprep.subr.mxu0 0.0
    %120 = vmatpush1.msra.mxu0 0.0
    %121 = vmatprep.subr.mxu0 0.0
    %122 = vmatpush1.msra.mxu0 0.0
    %123 = vmatprep.subr.mxu0 0.0
    %124 = vmatpush1.msra.mxu0 0.0
    %125 = vmatprep.subr.mxu0 0.0
    %126 = vmatpush1.msra.mxu0 0.0
    %127 = vmatprep.subr.mxu0 0.0
    %128 = vmatpush1.msra.mxu0 0.0
    %129 = vmatprep.subr.mxu0 0.0
    %130 = vmatpush1.msra.mxu0 0.0
    %131 = vmatprep.subr.mxu0 0.0
    %132 = vmatpush1.msra.mxu0 0.0
    %133 = vmatprep.subr.mxu0 0.0
    %134 = vmatpush1.msra.mxu0 0.0
    %135 = vmatprep.subr.mxu0 0.0
    %136 = vmatpush1.msra.mxu0 0.0
    %137 = vmatprep.subr.mxu0 0.0
    %138 = vmatpush1.msra.mxu0 0.0
    %139 = vmatprep.subr.mxu0 0.0
    %140 = vmatpush1.msra.mxu0 0.0
    %141 = vmatprep.subr.mxu0 0.0
    %142 = vmatpush1.msra.mxu0 0.0
    %143 = vmatprep.subr.mxu0 0.0
    %144 = vmatpush1.msra.mxu0 0.0
    %145 = vmatprep.subr.mxu0 0.0
    %146 = vmatpush1.msra.mxu0 0.0
    %147 = vmatprep.subr.mxu0 0.0
    %148 = vmatpush1.msra.mxu0 0.0
    %149 = vmatprep.subr.mxu0 0.0
    %150 = vmatpush1.msra.mxu0 0.0
    %151 = vmatprep.subr.mxu0 0.0
    %152 = vmatpush1.msra.mxu0 0.0
    %153 = vmatprep.subr.mxu0 0.0
    %154 = vmatpush1.msra.mxu0 0.0
    %155 = vmatprep.subr.mxu0 0.0
    %156 = vmatpush1.msra.mxu0 0.0
    %157 = vmatprep.mubr.f32.mxu0 0.0
    %158 = vmatmul.mubr.f32.gmra.mrb[0].mxu0 %v70
    %v159 = vpop.f32.mrb[0].mxu0
    %v160 = vadd.f32 0.0, %v159
    %v161 = vpop.f32.mrb[0].mxu0
    %v162 = vadd.f32 0.0, %v161
    %163 = vmatprep.mubr.f32.mxu0 0.0
    %164 = vmatmul.mubr.f32.gmra.mrb[0].mxu0 %v73
    %v165 = vpop.f32.mrb[0].mxu0
    %v166 = vadd.f32 0.0, %v165
    %v167 = vpop.f32.mrb[0].mxu0
    %v168 = vadd.f32 0.0, %v167
    %169 = vmatprep.mubr.f32.mxu0 0.0
    %170 = vmatmul.mubr.f32.gmra.mrb[0].mxu0 %v76
    %v171 = vpop.f32.mrb[0].mxu0
    %v172 = vadd.f32 0.0, %v171
    %v173 = vpop.f32.mrb[0].mxu0
    %v174 = vadd.f32 0.0, %v173
    %175 = vmatprep.mubr.f32.mxu0 0.0
    %176 = vmatmul.mubr.f32.gmra.mrb[0].mxu0 %v79
    %v177 = vpop.f32.mrb[0].mxu0
    %v178 = vadd.f32 0.0, %v177
    %v179 = vpop.f32.mrb[0].mxu0
    %v180 = vadd.f32 0.0, %v179
    %181 = vmatprep.mubr.f32.mxu0 0.0
    %182 = vmatmul.mubr.f32.gmra.mrb[0].mxu0 %v82
    %v183 = vpop.f32.mrb[0].mxu0
    %v184 = vadd.f32 0.0, %v183
    %v185 = vpop.f32.mrb[0].mxu0
    %v186 = vadd.f32 0.0, %v185
    %187 = vmatprep.mubr.f32.mxu0 0.0
    %188 = vmatmul.mubr.f32.gmra.mrb[0].mxu0 %v85
    %v189 = vpop.f32.mrb[0].mxu0
    %v190 = vadd.f32 0.0, %v189
    %v191 = vpop.f32.mrb[0].mxu0
    %v192 = vadd.f32 0.0, %v191
    %193 = vmatprep.mubr.f32.mxu0 0.0
    %194 = vmatmul.mubr.f32.gmra.mrb[0].mxu0 %v88
    %v195 = vpop.f32.mrb[0].mxu0
    %v196 = vadd.f32 0.0, %v195
    %v197 = vpop.f32.mrb[0].mxu0
    %v198 = vadd.f32 0.0, %v197
    %199 = vmatprep.mubr.f32.mxu0 0.0
    %200 = vmatmul.mubr.f32.gmra.mrb[0].mxu0 %v91
    %v201 = vpop.f32.mrb[0].mxu0
    %v202 = vadd.f32 0.0, %v201
    %v203 = vpop.f32.mrb[0].mxu0
    %v204 = vadd.f32 0.0, %v203
    %205 = vdwg.mxu0
    %206 = vmatprep.subr.mxu0 %v63
    %207 = vmatpush1.msra.mxu0 %v62
    %208 = vmatprep.subr.mxu0 %v67
    %209 = vmatpush1.msra.mxu0 %v66
    %210 = vmatprep.subr.mxu0 0.0
    %211 = vmatpush1.msra.mxu0 0.0
    %212 = vmatprep.subr.mxu0 0.0
    %213 = vmatpush1.msra.mxu0 0.0
    %214 = vmatprep.subr.mxu0 0.0
    %215 = vmatpush1.msra.mxu0 0.0
    %216 = vmatprep.subr.mxu0 0.0
    %217 = vmatpush1.msra.mxu0 0.0
    %218 = vmatprep.subr.mxu0 0.0
    %219 = vmatpush1.msra.mxu0 0.0
    %220 = vmatprep.subr.mxu0 0.0
    %221 = vmatpush1.msra.mxu0 0.0
    %222 = vmatprep.subr.mxu0 0.0
    %223 = vmatpush1.msra.mxu0 0.0
    %224 = vmatprep.subr.mxu0 0.0
    %225 = vmatpush1.msra.mxu0 0.0
    %226 = vmatprep.subr.mxu0 0.0
    %227 = vmatpush1.msra.mxu0 0.0
    %228 = vmatprep.subr.mxu0 0.0
    %229 = vmatpush1.msra.mxu0 0.0
    %230 = vmatprep.subr.mxu0 0.0
    %231 = vmatpush1.msra.mxu0 0.0
    %232 = vmatprep.subr.mxu0 0.0
    %233 = vmatpush1.msra.mxu0 0.0
    %234 = vmatprep.subr.mxu0 0.0
    %235 = vmatpush1.msra.mxu0 0.0
    %236 = vmatprep.subr.mxu0 0.0
    %237 = vmatpush1.msra.mxu0 0.0
    %238 = vmatprep.subr.mxu0 0.0
    %239 = vmatpush1.msra.mxu0 0.0
    %240 = vmatprep.subr.mxu0 0.0
    %241 = vmatpush1.msra.mxu0 0.0
    %242 = vmatprep.subr.mxu0 0.0
    %243 = vmatpush1.msra.mxu0 0.0
    %244 = vmatprep.subr.mxu0 0.0
    %245 = vmatpush1.msra.mxu0 0.0
    %246 = vmatprep.subr.mxu0 0.0
    %247 = vmatpush1.msra.mxu0 0.0
    %248 = vmatprep.subr.mxu0 0.0
    %249 = vmatpush1.msra.mxu0 0.0
    %250 = vmatprep.subr.mxu0 0.0
    %251 = vmatpush1.msra.mxu0 0.0
    %252 = vmatprep.subr.mxu0 0.0
    %253 = vmatpush1.msra.mxu0 0.0
    %254 = vmatprep.subr.mxu0 0.0
    %255 = vmatpush1.msra.mxu0 0.0
    %256 = vmatprep.subr.mxu0 0.0
    %257 = vmatpush1.msra.mxu0 0.0
    %258 = vmatprep.subr.mxu0 0.0
    %259 = vmatpush1.msra.mxu0 0.0
    %260 = vmatprep.subr.mxu0 0.0
    %261 = vmatpush1.msra.mxu0 0.0
    %262 = vmatprep.subr.mxu0 0.0
    %263 = vmatpush1.msra.mxu0 0.0
    %264 = vmatprep.subr.mxu0 0.0
    %265 = vmatpush1.msra.mxu0 0.0
    %266 = vmatprep.subr.mxu0 0.0
    %267 = vmatpush1.msra.mxu0 0.0
    %268 = vmatprep.subr.mxu0 0.0
    %269 = vmatpush1.msra.mxu0 0.0
    %270 = vmatprep.mubr.f32.mxu0 0.0
    %271 = vmatmul.mubr.f32.gmra.mrb[0].mxu0 %v70
    %v272 = vpop.f32.mrb[0].mxu0
    %v273 = vadd.f32 0.0, %v272
    %v274 = vpop.f32.mrb[0].mxu0
    %v275 = vadd.f32 0.0, %v274
    %276 = vmatprep.mubr.f32.mxu0 0.0
    %277 = vmatmul.mubr.f32.gmra.mrb[0].mxu0 %v73
    %v278 = vpop.f32.mrb[0].mxu0
    %v279 = vadd.f32 0.0, %v278
    %v280 = vpop.f32.mrb[0].mxu0
    %v281 = vadd.f32 0.0, %v280
    %282 = vmatprep.mubr.f32.mxu0 0.0
    %283 = vmatmul.mubr.f32.gmra.mrb[0].mxu0 %v76
    %v284 = vpop.f32.mrb[0].mxu0
    %v285 = vadd.f32 0.0, %v284
    %v286 = vpop.f32.mrb[0].mxu0
    %v287 = vadd.f32 0.0, %v286
    %288 = vmatprep.mubr.f32.mxu0 0.0
    %289 = vmatmul.mubr.f32.gmra.mrb[0].mxu0 %v79
    %v290 = vpop.f32.mrb[0].mxu0
    %v291 = vadd.f32 0.0, %v290
    %v292 = vpop.f32.mrb[0].mxu0
    %v293 = vadd.f32 0.0, %v292
    %294 = vmatprep.mubr.f32.mxu0 0.0
    %295 = vmatmul.mubr.f32.gmra.mrb[0].mxu0 %v82
    %v296 = vpop.f32.mrb[0].mxu0
    %v297 = vadd.f32 0.0, %v296
    %v298 = vpop.f32.mrb[0].mxu0
    %v299 = vadd.f32 0.0, %v298
    %300 = vmatprep.mubr.f32.mxu0 0.0
    %301 = vmatmul.mubr.f32.gmra.mrb[0].mxu0 %v85
    %v302 = vpop.f32.mrb[0].mxu0
    %v303 = vadd.f32 0.0, %v302
    %v304 = vpop.f32.mrb[0].mxu0
    %v305 = vadd.f32 0.0, %v304
    %306 = vmatprep.mubr.f32.mxu0 0.0
    %307 = vmatmul.mubr.f32.gmra.mrb[0].mxu0 %v88
    %v308 = vpop.f32.mrb[0].mxu0
    %v309 = vadd.f32 0.0, %v308
    %v310 = vpop.f32.mrb[0].mxu0
    %v311 = vadd.f32 0.0, %v310
    %312 = vmatprep.mubr.f32.mxu0 0.0
    %313 = vmatmul.mubr.f32.gmra.mrb[0].mxu0 %v91
    %v314 = vpop.f32.mrb[0].mxu0
    %v315 = vadd.f32 0.0, %v314
    %v316 = vpop.f32.mrb[0].mxu0
    %v317 = vadd.f32 0.0, %v316
    %318 = vdwg.mxu0
    %319 = vst [vmem:[#allocation2] sm:$0xff] %v160
    %320 = vst [vmem:[#allocation2 + $0x8] sm:$0xff] %v162
    %321 = vst [vmem:[#allocation2 + $0x10] sm:$0xff] %v273
    %322 = vst [vmem:[#allocation2 + $0x18] sm:$0xff] %v275
    %323 = vst [vmem:[#allocation2 + $0x20] sm:$0xff] %v166
    %324 = vst [vmem:[#allocation2 + $0x28] sm:$0xff] %v168
    %325 = vst [vmem:[#allocation2 + $0x30] sm:$0xff] %v279
    %326 = vst [vmem:[#allocation2 + $0x38] sm:$0xff] %v281
    %327 = vst [vmem:[#allocation2 + $0x40] sm:$0xff] %v172
    %328 = vst [vmem:[#allocation2 + $0x48] sm:$0xff] %v174
    %329 = vst [vmem:[#allocation2 + $0x50] sm:$0xff] %v285
    %330 = vst [vmem:[#allocation2 + $0x58] sm:$0xff] %v287
    %331 = vst [vmem:[#allocation2 + $0x60] sm:$0xff] %v178
    %332 = vst [vmem:[#allocation2 + $0x68] sm:$0xff] %v180
    %333 = vst [vmem:[#allocation2 + $0x70] sm:$0xff] %v291
    %334 = vst [vmem:[#allocation2 + $0x78] sm:$0xff] %v293
    %335 = vst [vmem:[#allocation2 + $0x80] sm:$0xff] %v184
    %336 = vst [vmem:[#allocation2 + $0x88] sm:$0xff] %v186
    %337 = vst [vmem:[#allocation2 + $0x90] sm:$0xff] %v297
    %338 = vst [vmem:[#allocation2 + $0x98] sm:$0xff] %v299
    %339 = vst [vmem:[#allocation2 + $0xa0] sm:$0xff] %v190
    %340 = vst [vmem:[#allocation2 + $0xa8] sm:$0xff] %v192
    %341 = vst [vmem:[#allocation2 + $0xb0] sm:$0xff] %v303
    %342 = vst [vmem:[#allocation2 + $0xb8] sm:$0xff] %v305
    %343 = vst [vmem:[#allocation2 + $0xc0] sm:$0xff] %v196
    %344 = vst [vmem:[#allocation2 + $0xc8] sm:$0xff] %v198
    %345 = vst [vmem:[#allocation2 + $0xd0] sm:$0xff] %v309
    %346 = vst [vmem:[#allocation2 + $0xd8] sm:$0xff] %v311
    %347 = vst [vmem:[#allocation2 + $0xe0] sm:$0xff] %v202
    %348 = vst [vmem:[#allocation2 + $0xe8] sm:$0xff] %v204
    %349 = vst [vmem:[#allocation2 + $0xf0] sm:$0xff] %v315
    %350 = vst [vmem:[#allocation2 + $0xf8] sm:$0xff] %v317
    %v351 = vld [vmem:[%s3] sm:$0xf]
    %s352 = smul.u32 0, 4
    %s353 = smul.addr %s352, 8
    %s354 = scalar_lea.vmem [#allocation2], %s353
    %v355 = vld [vmem:[%s354] sm:$0xff]
    %v356 = vld [vmem:[%s354 + $0x8] sm:$0xff]
    %v357 = vld [vmem:[%s354 + $0x10] sm:$0xff]
    %v358 = vld [vmem:[%s354 + $0x18] sm:$0xff]
    %v360 = vlaneseq
    %v361 = vshrl.u32 %v360, 7
    %v362 = vsub.s32 0, %v361
    %v363 = vrot.slane %v351, %v362
    %v364 = vlaneseq
    %v365 = vshrl.u32 %v364, 7
    %v366 = vsub.s32 1, %v365
    %v367 = vrot.slane %v351, %v366
    %v368 = vlaneseq
    %v369 = vshrl.u32 %v368, 7
    %v370 = vsub.s32 2, %v369
    %v371 = vrot.slane %v351, %v370
    %v372 = vlaneseq
    %v373 = vshrl.u32 %v372, 7
    %v374 = vsub.s32 3, %v373
    %v375 = vrot.slane %v351, %v374
    %v380 = vadd.f32 %v355, %v363
    %v381 = vadd.f32 %v356, %v367
    %v382 = vadd.f32 %v357, %v371
    %v383 = vadd.f32 %v358, %v375
    %v384 = vld [vmem:[#allocation3] sm:$0xff]
    %v385 = vld [vmem:[#allocation3 + $0x8] sm:$0xff]
    %v386 = vld [vmem:[#allocation3 + $0x10] sm:$0xff]
    %v387 = vld [vmem:[#allocation3 + $0x18] sm:$0xff]
    %v388 = vld [vmem:[#allocation3 + $0x20] sm:$0xff]
    %v389 = vld [vmem:[#allocation3 + $0x28] sm:$0xff]
    %v390 = vld [vmem:[#allocation3 + $0x30] sm:$0xff]
    %v391 = vld [vmem:[#allocation3 + $0x38] sm:$0xff]
    %v392 = vld [vmem:[#allocation3 + $0x40] sm:$0xff]
    %v393 = vld [vmem:[#allocation3 + $0x48] sm:$0xff]
    %v394 = vld [vmem:[#allocation3 + $0x50] sm:$0xff]
    %v395 = vld [vmem:[#allocation3 + $0x58] sm:$0xff]
    %v396 = vld [vmem:[#allocation3 + $0x60] sm:$0xff]
    %v397 = vld [vmem:[#allocation3 + $0x68] sm:$0xff]
    %v398 = vld [vmem:[#allocation3 + $0x70] sm:$0xff]
    %v399 = vld [vmem:[#allocation3 + $0x78] sm:$0xff]
    %v400 = vld [vmem:[#allocation3 + $0x80] sm:$0xff]
    %v401 = vld [vmem:[#allocation3 + $0x88] sm:$0xff]
    %v402 = vld [vmem:[#allocation3 + $0x90] sm:$0xff]
    %v403 = vld [vmem:[#allocation3 + $0x98] sm:$0xff]
    %v404 = vld [vmem:[#allocation3 + $0xa0] sm:$0xff]
    %v405 = vld [vmem:[#allocation3 + $0xa8] sm:$0xff]
    %v406 = vld [vmem:[#allocation3 + $0xb0] sm:$0xff]
    %v407 = vld [vmem:[#allocation3 + $0xb8] sm:$0xff]
    %v408 = vld [vmem:[#allocation3 + $0xc0] sm:$0xff]
    %v409 = vld [vmem:[#allocation3 + $0xc8] sm:$0xff]
    %v410 = vld [vmem:[#allocation3 + $0xd0] sm:$0xff]
    %v411 = vld [vmem:[#allocation3 + $0xd8] sm:$0xff]
    %v412 = vld [vmem:[#allocation3 + $0xe0] sm:$0xff]
    %v413 = vld [vmem:[#allocation3 + $0xe8] sm:$0xff]
    %v414 = vld [vmem:[#allocation3 + $0xf0] sm:$0xff]
    %v415 = vld [vmem:[#allocation3 + $0xf8] sm:$0xff]
    %v416 = vld [vmem:[#allocation3 + $0x100] sm:$0xff]
    %v417 = vld [vmem:[#allocation3 + $0x108] sm:$0xff]
    %v418 = vld [vmem:[#allocation3 + $0x110] sm:$0xff]
    %v419 = vld [vmem:[#allocation3 + $0x118] sm:$0xff]
    %v420 = vld [vmem:[#allocation3 + $0x120] sm:$0xff]
    %v421 = vld [vmem:[#allocation3 + $0x128] sm:$0xff]
    %v422 = vld [vmem:[#allocation3 + $0x130] sm:$0xff]
    %v423 = vld [vmem:[#allocation3 + $0x138] sm:$0xff]
    %v424 = vld [vmem:[#allocation3 + $0x140] sm:$0xff]
    %v425 = vld [vmem:[#allocation3 + $0x148] sm:$0xff]
    %v426 = vld [vmem:[#allocation3 + $0x150] sm:$0xff]
    %v427 = vld [vmem:[#allocation3 + $0x158] sm:$0xff]
    %v428 = vld [vmem:[#allocation3 + $0x160] sm:$0xff]
    %v429 = vld [vmem:[#allocation3 + $0x168] sm:$0xff]
    %v430 = vld [vmem:[#allocation3 + $0x170] sm:$0xff]
    %v431 = vld [vmem:[#allocation3 + $0x178] sm:$0xff]
    %v432 = vld [vmem:[#allocation3 + $0x180] sm:$0xff]
    %v433 = vld [vmem:[#allocation3 + $0x188] sm:$0xff]
    %v434 = vld [vmem:[#allocation3 + $0x190] sm:$0xff]
    %v435 = vld [vmem:[#allocation3 + $0x198] sm:$0xff]
    %v436 = vld [vmem:[#allocation3 + $0x1a0] sm:$0xff]
    %v437 = vld [vmem:[#allocation3 + $0x1a8] sm:$0xff]
    %v438 = vld [vmem:[#allocation3 + $0x1b0] sm:$0xff]
    %v439 = vld [vmem:[#allocation3 + $0x1b8] sm:$0xff]
    %v440 = vld [vmem:[#allocation3 + $0x1c0] sm:$0xff]
    %v441 = vld [vmem:[#allocation3 + $0x1c8] sm:$0xff]
    %v442 = vld [vmem:[#allocation3 + $0x1d0] sm:$0xff]
    %v443 = vld [vmem:[#allocation3 + $0x1d8] sm:$0xff]
    %v444 = vld [vmem:[#allocation3 + $0x1e0] sm:$0xff]
    %v445 = vld [vmem:[#allocation3 + $0x1e8] sm:$0xff]
    %v446 = vld [vmem:[#allocation3 + $0x1f0] sm:$0xff]
    %v447 = vld [vmem:[#allocation3 + $0x1f8] sm:$0xff]
    %448 = vmatprep.subr.mxu0 %v385
    %449 = vmatpush1.msra.mxu0 %v384
    %450 = vmatprep.subr.mxu0 %v389
    %451 = vmatpush1.msra.mxu0 %v388
    %452 = vmatprep.subr.mxu0 %v393
    %453 = vmatpush1.msra.mxu0 %v392
    %454 = vmatprep.subr.mxu0 %v397
    %455 = vmatpush1.msra.mxu0 %v396
    %456 = vmatprep.subr.mxu0 %v401
    %457 = vmatpush1.msra.mxu0 %v400
    %458 = vmatprep.subr.mxu0 %v405
    %459 = vmatpush1.msra.mxu0 %v404
    %460 = vmatprep.subr.mxu0 %v409
    %461 = vmatpush1.msra.mxu0 %v408
    %462 = vmatprep.subr.mxu0 %v413
    %463 = vmatpush1.msra.mxu0 %v412
    %464 = vmatprep.subr.mxu0 %v417
    %465 = vmatpush1.msra.mxu0 %v416
    %466 = vmatprep.subr.mxu0 %v421
    %467 = vmatpush1.msra.mxu0 %v420
    %468 = vmatprep.subr.mxu0 %v425
    %469 = vmatpush1.msra.mxu0 %v424
    %470 = vmatprep.subr.mxu0 %v429
    %471 = vmatpush1.msra.mxu0 %v428
    %472 = vmatprep.subr.mxu0 %v433
    %473 = vmatpush1.msra.mxu0 %v432
    %474 = vmatprep.subr.mxu0 %v437
    %475 = vmatpush1.msra.mxu0 %v436
    %476 = vmatprep.subr.mxu0 %v441
    %477 = vmatpush1.msra.mxu0 %v440
    %478 = vmatprep.subr.mxu0 %v445
    %479 = vmatpush1.msra.mxu0 %v444
    %480 = vmatprep.subr.mxu0 0.0
    %481 = vmatpush1.msra.mxu0 0.0
    %482 = vmatprep.subr.mxu0 0.0
    %483 = vmatpush1.msra.mxu0 0.0
    %484 = vmatprep.subr.mxu0 0.0
    %485 = vmatpush1.msra.mxu0 0.0
    %486 = vmatprep.subr.mxu0 0.0
    %487 = vmatpush1.msra.mxu0 0.0
    %488 = vmatprep.subr.mxu0 0.0
    %489 = vmatpush1.msra.mxu0 0.0
    %490 = vmatprep.subr.mxu0 0.0
    %491 = vmatpush1.msra.mxu0 0.0
    %492 = vmatprep.subr.mxu0 0.0
    %493 = vmatpush1.msra.mxu0 0.0
    %494 = vmatprep.subr.mxu0 0.0
    %495 = vmatpush1.msra.mxu0 0.0
    %496 = vmatprep.subr.mxu0 0.0
    %497 = vmatpush1.msra.mxu0 0.0
    %498 = vmatprep.subr.mxu0 0.0
    %499 = vmatpush1.msra.mxu0 0.0
    %500 = vmatprep.subr.mxu0 0.0
    %501 = vmatpush1.msra.mxu0 0.0
    %502 = vmatprep.subr.mxu0 0.0
    %503 = vmatpush1.msra.mxu0 0.0
    %504 = vmatprep.subr.mxu0 0.0
    %505 = vmatpush1.msra.mxu0 0.0
    %506 = vmatprep.subr.mxu0 0.0
    %507 = vmatpush1.msra.mxu0 0.0
    %508 = vmatprep.subr.mxu0 0.0
    %509 = vmatpush1.msra.mxu0 0.0
    %510 = vmatprep.subr.mxu0 0.0
    %511 = vmatpush1.msra.mxu0 0.0
    %512 = vmatprep.mubr.f32.mxu0 0.0
    %513 = vmatmul.mubr.f32.gmra.mrb[0].mxu0 0.0
    %v514 = vpop.f32.mrb[0].mxu0
    %v515 = vadd.f32 0.0, %v514
    %v516 = vpop.f32.mrb[0].mxu0
    %v517 = vadd.f32 0.0, %v516
    %518 = vdwg.mxu0
    %519 = vmatprep.subr.mxu0 %v387
    %520 = vmatpush1.msra.mxu0 %v386
    %521 = vmatprep.subr.mxu0 %v391
    %522 = vmatpush1.msra.mxu0 %v390
    %523 = vmatprep.subr.mxu0 %v395
    %524 = vmatpush1.msra.mxu0 %v394
    %525 = vmatprep.subr.mxu0 %v399
    %526 = vmatpush1.msra.mxu0 %v398
    %527 = vmatprep.subr.mxu0 %v403
    %528 = vmatpush1.msra.mxu0 %v402
    %529 = vmatprep.subr.mxu0 %v407
    %530 = vmatpush1.msra.mxu0 %v406
    %531 = vmatprep.subr.mxu0 %v411
    %532 = vmatpush1.msra.mxu0 %v410
    %533 = vmatprep.subr.mxu0 %v415
    %534 = vmatpush1.msra.mxu0 %v414
    %535 = vmatprep.subr.mxu0 %v419
    %536 = vmatpush1.msra.mxu0 %v418
    %537 = vmatprep.subr.mxu0 %v423
    %538 = vmatpush1.msra.mxu0 %v422
    %539 = vmatprep.subr.mxu0 %v427
    %540 = vmatpush1.msra.mxu0 %v426
    %541 = vmatprep.subr.mxu0 %v431
    %542 = vmatpush1.msra.mxu0 %v430
    %543 = vmatprep.subr.mxu0 %v435
    %544 = vmatpush1.msra.mxu0 %v434
    %545 = vmatprep.subr.mxu0 %v439
    %546 = vmatpush1.msra.mxu0 %v438
    %547 = vmatprep.subr.mxu0 %v443
    %548 = vmatpush1.msra.mxu0 %v442
    %549 = vmatprep.subr.mxu0 %v447
    %550 = vmatpush1.msra.mxu0 %v446
    %551 = vmatprep.subr.mxu0 0.0
    %552 = vmatpush1.msra.mxu0 0.0
    %553 = vmatprep.subr.mxu0 0.0
    %554 = vmatpush1.msra.mxu0 0.0
    %555 = vmatprep.subr.mxu0 0.0
    %556 = vmatpush1.msra.mxu0 0.0
    %557 = vmatprep.subr.mxu0 0.0
    %558 = vmatpush1.msra.mxu0 0.0
    %559 = vmatprep.subr.mxu0 0.0
    %560 = vmatpush1.msra.mxu0 0.0
    %561 = vmatprep.subr.mxu0 0.0
    %562 = vmatpush1.msra.mxu0 0.0
    %563 = vmatprep.subr.mxu0 0.0
    %564 = vmatpush1.msra.mxu0 0.0
    %565 = vmatprep.subr.mxu0 0.0
    %566 = vmatpush1.msra.mxu0 0.0
    %567 = vmatprep.subr.mxu0 0.0
    %568 = vmatpush1.msra.mxu0 0.0
    %569 = vmatprep.subr.mxu0 0.0
    %570 = vmatpush1.msra.mxu0 0.0
    %571 = vmatprep.subr.mxu0 0.0
    %572 = vmatpush1.msra.mxu0 0.0
    %573 = vmatprep.subr.mxu0 0.0
    %574 = vmatpush1.msra.mxu0 0.0
    %575 = vmatprep.subr.mxu0 0.0
    %576 = vmatpush1.msra.mxu0 0.0
    %577 = vmatprep.subr.mxu0 0.0
    %578 = vmatpush1.msra.mxu0 0.0
    %579 = vmatprep.subr.mxu0 0.0
    %580 = vmatpush1.msra.mxu0 0.0
    %581 = vmatprep.subr.mxu0 0.0
    %582 = vmatpush1.msra.mxu0 0.0
    %583 = vmatprep.mubr.f32.mxu0 0.0
    %584 = vmatmul.mubr.f32.gmra.mrb[0].mxu0 0.0
    %v585 = vpop.f32.mrb[0].mxu0
    %v586 = vadd.f32 0.0, %v585
    %v587 = vpop.f32.mrb[0].mxu0
    %v588 = vadd.f32 0.0, %v587
    %589 = vdwg.mxu0
    %v590 = vadd.f32 %v380, %v515
    %v591 = vadd.f32 %v381, %v517
    %v592 = vadd.f32 %v382, %v586
    %v593 = vadd.f32 %v383, %v588
    %v594 = vxor.u32 %v590, 2147483648
    %v595 = vxor.u32 %v591, 2147483648
    %v596 = vxor.u32 %v592, 2147483648
    %v597 = vmul.f32 %v594, 1.442695
    %v598 = vpow.pop %v597
    %v599 = vmul.f32 %v595, 1.442695
    %v600 = vpow.pop %v599
    %v601 = vmul.f32 %v596, 1.442695
    %v602 = vpow.pop %v601
    %v603 = vadd.f32 %v598, 1.0
    %v604 = vadd.f32 %v600, 1.0
    %v605 = vadd.f32 %v602, 1.0
    %v606 = vrcp.pop %v603
    %v607 = vmul.f32 1.0, %v606
    %v608 = vrcp.pop %v604
    %v609 = vmul.f32 1.0, %v608
    %v610 = vrcp.pop %v605
    %v611 = vmul.f32 1.0, %v610
    %v612 = vtanh.pop %v593
    %v613 = vmul.f32 %v609, 0.0
    %v614 = vmul.f32 %v607, %v612
    %v615 = vadd.f32 %v613, %v614
    %v616 = vtanh.pop %v615
    %v617 = vmul.f32 %v611, %v616
    %s618 = smul.u32 1, 4
    %s619 = smul.addr %s618, 8
    %s620 = scalar_lea.vmem [#allocation2], %s619
    %v621 = vld [vmem:[%s620] sm:$0xff]
    %v622 = vld [vmem:[%s620 + $0x8] sm:$0xff]
    %v623 = vld [vmem:[%s620 + $0x10] sm:$0xff]
    %v624 = vld [vmem:[%s620 + $0x18] sm:$0xff]
    %v625 = vadd.f32 %v621, %v363
    %v626 = vadd.f32 %v622, %v367
    %v627 = vadd.f32 %v623, %v371
    %v628 = vadd.f32 %v624, %v375
    %629 = vmatprep.subr.mxu0 %v385
    %630 = vmatpush1.msra.mxu0 %v384
    %631 = vmatprep.subr.mxu0 %v389
    %632 = vmatpush1.msra.mxu0 %v388
    %633 = vmatprep.subr.mxu0 %v393
    %634 = vmatpush1.msra.mxu0 %v392
    %635 = vmatprep.subr.mxu0 %v397
    %636 = vmatpush1.msra.mxu0 %v396
    %637 = vmatprep.subr.mxu0 %v401
    %638 = vmatpush1.msra.mxu0 %v400
    %639 = vmatprep.subr.mxu0 %v405
    %640 = vmatpush1.msra.mxu0 %v404
    %641 = vmatprep.subr.mxu0 %v409
    %642 = vmatpush1.msra.mxu0 %v408
    %643 = vmatprep.subr.mxu0 %v413
    %644 = vmatpush1.msra.mxu0 %v412
    %645 = vmatprep.subr.mxu0 %v417
    %646 = vmatpush1.msra.mxu0 %v416
    %647 = vmatprep.subr.mxu0 %v421
    %648 = vmatpush1.msra.mxu0 %v420
    %649 = vmatprep.subr.mxu0 %v425
    %650 = vmatpush1.msra.mxu0 %v424
    %651 = vmatprep.subr.mxu0 %v429
    %652 = vmatpush1.msra.mxu0 %v428
    %653 = vmatprep.subr.mxu0 %v433
    %654 = vmatpush1.msra.mxu0 %v432
    %655 = vmatprep.subr.mxu0 %v437
    %656 = vmatpush1.msra.mxu0 %v436
    %657 = vmatprep.subr.mxu0 %v441
    %658 = vmatpush1.msra.mxu0 %v440
    %659 = vmatprep.subr.mxu0 %v445
    %660 = vmatpush1.msra.mxu0 %v444
    %661 = vmatprep.subr.mxu0 0.0
    %662 = vmatpush1.msra.mxu0 0.0
    %663 = vmatprep.subr.mxu0 0.0
    %664 = vmatpush1.msra.mxu0 0.0
    %665 = vmatprep.subr.mxu0 0.0
    %666 = vmatpush1.msra.mxu0 0.0
    %667 = vmatprep.subr.mxu0 0.0
    %668 = vmatpush1.msra.mxu0 0.0
    %669 = vmatprep.subr.mxu0 0.0
    %670 = vmatpush1.msra.mxu0 0.0
    %671 = vmatprep.subr.mxu0 0.0
    %672 = vmatpush1.msra.mxu0 0.0
    %673 = vmatprep.subr.mxu0 0.0
    %674 = vmatpush1.msra.mxu0 0.0
    %675 = vmatprep.subr.mxu0 0.0
    %676 = vmatpush1.msra.mxu0 0.0
    %677 = vmatprep.subr.mxu0 0.0
    %678 = vmatpush1.msra.mxu0 0.0
    %679 = vmatprep.subr.mxu0 0.0
    %680 = vmatpush1.msra.mxu0 0.0
    %681 = vmatprep.subr.mxu0 0.0
    %682 = vmatpush1.msra.mxu0 0.0
    %683 = vmatprep.subr.mxu0 0.0
    %684 = vmatpush1.msra.mxu0 0.0
    %685 = vmatprep.subr.mxu0 0.0
    %686 = vmatpush1.msra.mxu0 0.0
    %687 = vmatprep.subr.mxu0 0.0
    %688 = vmatpush1.msra.mxu0 0.0
    %689 = vmatprep.subr.mxu0 0.0
    %690 = vmatpush1.msra.mxu0 0.0
    %691 = vmatprep.subr.mxu0 0.0
    %692 = vmatpush1.msra.mxu0 0.0
    %693 = vmatprep.mubr.f32.mxu0 0.0
    %694 = vmatmul.mubr.f32.gmra.mrb[0].mxu0 %v617
    %v695 = vpop.f32.mrb[0].mxu0
    %v696 = vadd.f32 0.0, %v695
    %v697 = vpop.f32.mrb[0].mxu0
    %v698 = vadd.f32 0.0, %v697
    %699 = vdwg.mxu0
    %700 = vmatprep.subr.mxu0 %v387
    %701 = vmatpush1.msra.mxu0 %v386
    %702 = vmatprep.subr.mxu0 %v391
    %703 = vmatpush1.msra.mxu0 %v390
    %704 = vmatprep.subr.mxu0 %v395
    %705 = vmatpush1.msra.mxu0 %v394
    %706 = vmatprep.subr.mxu0 %v399
    %707 = vmatpush1.msra.mxu0 %v398
    %708 = vmatprep.subr.mxu0 %v403
    %709 = vmatpush1.msra.mxu0 %v402
    %710 = vmatprep.subr.mxu0 %v407
    %711 = vmatpush1.msra.mxu0 %v406
    %712 = vmatprep.subr.mxu0 %v411
    %713 = vmatpush1.msra.mxu0 %v410
    %714 = vmatprep.subr.mxu0 %v415
    %715 = vmatpush1.msra.mxu0 %v414
    %716 = vmatprep.subr.mxu0 %v419
    %717 = vmatpush1.msra.mxu0 %v418
    %718 = vmatprep.subr.mxu0 %v423
    %719 = vmatpush1.msra.mxu0 %v422
    %720 = vmatprep.subr.mxu0 %v427
    %721 = vmatpush1.msra.mxu0 %v426
    %722 = vmatprep.subr.mxu0 %v431
    %723 = vmatpush1.msra.mxu0 %v430
    %724 = vmatprep.subr.mxu0 %v435
    %725 = vmatpush1.msra.mxu0 %v434
    %726 = vmatprep.subr.mxu0 %v439
    %727 = vmatpush1.msra.mxu0 %v438
    %728 = vmatprep.subr.mxu0 %v443
    %729 = vmatpush1.msra.mxu0 %v442
    %730 = vmatprep.subr.mxu0 %v447
    %731 = vmatpush1.msra.mxu0 %v446
    %732 = vmatprep.subr.mxu0 0.0
    %733 = vmatpush1.msra.mxu0 0.0
    %734 = vmatprep.subr.mxu0 0.0
    %735 = vmatpush1.msra.mxu0 0.0
    %736 = vmatprep.subr.mxu0 0.0
    %737 = vmatpush1.msra.mxu0 0.0
    %738 = vmatprep.subr.mxu0 0.0
    %739 = vmatpush1.msra.mxu0 0.0
    %740 = vmatprep.subr.mxu0 0.0
    %741 = vmatpush1.msra.mxu0 0.0
    %742 = vmatprep.subr.mxu0 0.0
    %743 = vmatpush1.msra.mxu0 0.0
    %744 = vmatprep.subr.mxu0 0.0
    %745 = vmatpush1.msra.mxu0 0.0
    %746 = vmatprep.subr.mxu0 0.0
    %747 = vmatpush1.msra.mxu0 0.0
    %748 = vmatprep.subr.mxu0 0.0
    %749 = vmatpush1.msra.mxu0 0.0
    %750 = vmatprep.subr.mxu0 0.0
    %751 = vmatpush1.msra.mxu0 0.0
    %752 = vmatprep.subr.mxu0 0.0
    %753 = vmatpush1.msra.mxu0 0.0
    %754 = vmatprep.subr.mxu0 0.0
    %755 = vmatpush1.msra.mxu0 0.0
    %756 = vmatprep.subr.mxu0 0.0
    %757 = vmatpush1.msra.mxu0 0.0
    %758 = vmatprep.subr.mxu0 0.0
    %759 = vmatpush1.msra.mxu0 0.0
    %760 = vmatprep.subr.mxu0 0.0
    %761 = vmatpush1.msra.mxu0 0.0
    %762 = vmatprep.subr.mxu0 0.0
    %763 = vmatpush1.msra.mxu0 0.0
    %764 = vmatprep.mubr.f32.mxu0 0.0
    %765 = vmatmul.mubr.f32.gmra.mrb[0].mxu0 %v617
    %v766 = vpop.f32.mrb[0].mxu0
    %v767 = vadd.f32 0.0, %v766
    %v768 = vpop.f32.mrb[0].mxu0
    %v769 = vadd.f32 0.0, %v768
    %770 = vdwg.mxu0
    %v771 = vadd.f32 %v625, %v696
    %v772 = vadd.f32 %v626, %v698
    %v773 = vadd.f32 %v627, %v767
    %v774 = vadd.f32 %v628, %v769
    %v775 = vxor.u32 %v771, 2147483648
    %v776 = vxor.u32 %v772, 2147483648
    %v777 = vxor.u32 %v773, 2147483648
    %v778 = vmul.f32 %v775, 1.442695
    %v779 = vpow.pop %v778
    %v780 = vmul.f32 %v776, 1.442695
    %v781 = vpow.pop %v780
    %v782 = vmul.f32 %v777, 1.442695
    %v783 = vpow.pop %v782
    %v784 = vadd.f32 %v779, 1.0
    %v785 = vadd.f32 %v781, 1.0
    %v786 = vadd.f32 %v783, 1.0
    %v787 = vrcp.pop %v784
    %v788 = vmul.f32 1.0, %v787
    %v789 = vrcp.pop %v785
    %v790 = vmul.f32 1.0, %v789
    %v791 = vrcp.pop %v786
    %v792 = vmul.f32 1.0, %v791
    %v793 = vtanh.pop %v774
    %v794 = vmul.f32 %v790, %v615
    %v795 = vmul.f32 %v788, %v793
    %v796 = vadd.f32 %v794, %v795
    %v797 = vtanh.pop %v796
    %v798 = vmul.f32 %v792, %v797
    %s799 = smul.u32 2, 4
    %s800 = smul.addr %s799, 8
    %s801 = scalar_lea.vmem [#allocation2], %s800
    %v802 = vld [vmem:[%s801] sm:$0xff]
    %v803 = vld [vmem:[%s801 + $0x8] sm:$0xff]
    %v804 = vld [vmem:[%s801 + $0x10] sm:$0xff]
    %v805 = vld [vmem:[%s801 + $0x18] sm:$0xff]
    %v806 = vadd.f32 %v802, %v363
    %v807 = vadd.f32 %v803, %v367
    %v808 = vadd.f32 %v804, %v371
    %v809 = vadd.f32 %v805, %v375
    %810 = vmatprep.subr.mxu0 %v385
    %811 = vmatpush1.msra.mxu0 %v384
    %812 = vmatprep.subr.mxu0 %v389
    %813 = vmatpush1.msra.mxu0 %v388
    %814 = vmatprep.subr.mxu0 %v393
    %815 = vmatpush1.msra.mxu0 %v392
    %816 = vmatprep.subr.mxu0 %v397
    %817 = vmatpush1.msra.mxu0 %v396
    %818 = vmatprep.subr.mxu0 %v401
    %819 = vmatpush1.msra.mxu0 %v400
    %820 = vmatprep.subr.mxu0 %v405
    %821 = vmatpush1.msra.mxu0 %v404
    %822 = vmatprep.subr.mxu0 %v409
    %823 = vmatpush1.msra.mxu0 %v408
    %824 = vmatprep.subr.mxu0 %v413
    %825 = vmatpush1.msra.mxu0 %v412
    %826 = vmatprep.subr.mxu0 %v417
    %827 = vmatpush1.msra.mxu0 %v416
    %828 = vmatprep.subr.mxu0 %v421
    %829 = vmatpush1.msra.mxu0 %v420
    %830 = vmatprep.subr.mxu0 %v425
    %831 = vmatpush1.msra.mxu0 %v424
    %832 = vmatprep.subr.mxu0 %v429
    %833 = vmatpush1.msra.mxu0 %v428
    %834 = vmatprep.subr.mxu0 %v433
    %835 = vmatpush1.msra.mxu0 %v432
    %836 = vmatprep.subr.mxu0 %v437
    %837 = vmatpush1.msra.mxu0 %v436
    %838 = vmatprep.subr.mxu0 %v441
    %839 = vmatpush1.msra.mxu0 %v440
    %840 = vmatprep.subr.mxu0 %v445
    %841 = vmatpush1.msra.mxu0 %v444
    %842 = vmatprep.subr.mxu0 0.0
    %843 = vmatpush1.msra.mxu0 0.0
    %844 = vmatprep.subr.mxu0 0.0
    %845 = vmatpush1.msra.mxu0 0.0
    %846 = vmatprep.subr.mxu0 0.0
    %847 = vmatpush1.msra.mxu0 0.0
    %848 = vmatprep.subr.mxu0 0.0
    %849 = vmatpush1.msra.mxu0 0.0
    %850 = vmatprep.subr.mxu0 0.0
    %851 = vmatpush1.msra.mxu0 0.0
    %852 = vmatprep.subr.mxu0 0.0
    %853 = vmatpush1.msra.mxu0 0.0
    %854 = vmatprep.subr.mxu0 0.0
    %855 = vmatpush1.msra.mxu0 0.0
    %856 = vmatprep.subr.mxu0 0.0
    %857 = vmatpush1.msra.mxu0 0.0
    %858 = vmatprep.subr.mxu0 0.0
    %859 = vmatpush1.msra.mxu0 0.0
    %860 = vmatprep.subr.mxu0 0.0
    %861 = vmatpush1.msra.mxu0 0.0
    %862 = vmatprep.subr.mxu0 0.0
    %863 = vmatpush1.msra.mxu0 0.0
    %864 = vmatprep.subr.mxu0 0.0
    %865 = vmatpush1.msra.mxu0 0.0
    %866 = vmatprep.subr.mxu0 0.0
    %867 = vmatpush1.msra.mxu0 0.0
    %868 = vmatprep.subr.mxu0 0.0
    %869 = vmatpush1.msra.mxu0 0.0
    %870 = vmatprep.subr.mxu0 0.0
    %871 = vmatpush1.msra.mxu0 0.0
    %872 = vmatprep.subr.mxu0 0.0
    %873 = vmatpush1.msra.mxu0 0.0
    %874 = vmatprep.mubr.f32.mxu0 0.0
    %875 = vmatmul.mubr.f32.gmra.mrb[0].mxu0 %v798
    %v876 = vpop.f32.mrb[0].mxu0
    %v877 = vadd.f32 0.0, %v876
    %v878 = vpop.f32.mrb[0].mxu0
    %v879 = vadd.f32 0.0, %v878
    %880 = vdwg.mxu0
    %881 = vmatprep.subr.mxu0 %v387
    %882 = vmatpush1.msra.mxu0 %v386
    %883 = vmatprep.subr.mxu0 %v391
    %884 = vmatpush1.msra.mxu0 %v390
    %885 = vmatprep.subr.mxu0 %v395
    %886 = vmatpush1.msra.mxu0 %v394
    %887 = vmatprep.subr.mxu0 %v399
    %888 = vmatpush1.msra.mxu0 %v398
    %889 = vmatprep.subr.mxu0 %v403
    %890 = vmatpush1.msra.mxu0 %v402
    %891 = vmatprep.subr.mxu0 %v407
    %892 = vmatpush1.msra.mxu0 %v406
    %893 = vmatprep.subr.mxu0 %v411
    %894 = vmatpush1.msra.mxu0 %v410
    %895 = vmatprep.subr.mxu0 %v415
    %896 = vmatpush1.msra.mxu0 %v414
    %897 = vmatprep.subr.mxu0 %v419
    %898 = vmatpush1.msra.mxu0 %v418
    %899 = vmatprep.subr.mxu0 %v423
    %900 = vmatpush1.msra.mxu0 %v422
    %901 = vmatprep.subr.mxu0 %v427
    %902 = vmatpush1.msra.mxu0 %v426
    %903 = vmatprep.subr.mxu0 %v431
    %904 = vmatpush1.msra.mxu0 %v430
    %905 = vmatprep.subr.mxu0 %v435
    %906 = vmatpush1.msra.mxu0 %v434
    %907 = vmatprep.subr.mxu0 %v439
    %908 = vmatpush1.msra.mxu0 %v438
    %909 = vmatprep.subr.mxu0 %v443
    %910 = vmatpush1.msra.mxu0 %v442
    %911 = vmatprep.subr.mxu0 %v447
    %912 = vmatpush1.msra.mxu0 %v446
    %913 = vmatprep.subr.mxu0 0.0
    %914 = vmatpush1.msra.mxu0 0.0
    %915 = vmatprep.subr.mxu0 0.0
    %916 = vmatpush1.msra.mxu0 0.0
    %917 = vmatprep.subr.mxu0 0.0
    %918 = vmatpush1.msra.mxu0 0.0
    %919 = vmatprep.subr.mxu0 0.0
    %920 = vmatpush1.msra.mxu0 0.0
    %921 = vmatprep.subr.mxu0 0.0
    %922 = vmatpush1.msra.mxu0 0.0
    %923 = vmatprep.subr.mxu0 0.0
    %924 = vmatpush1.msra.mxu0 0.0
    %925 = vmatprep.subr.mxu0 0.0
    %926 = vmatpush1.msra.mxu0 0.0
    %927 = vmatprep.subr.mxu0 0.0
    %928 = vmatpush1.msra.mxu0 0.0
    %929 = vmatprep.subr.mxu0 0.0
    %930 = vmatpush1.msra.mxu0 0.0
    %931 = vmatprep.subr.mxu0 0.0
    %932 = vmatpush1.msra.mxu0 0.0
    %933 = vmatprep.subr.mxu0 0.0
    %934 = vmatpush1.msra.mxu0 0.0
    %935 = vmatprep.subr.mxu0 0.0
    %936 = vmatpush1.msra.mxu0 0.0
    %937 = vmatprep.subr.mxu0 0.0
    %938 = vmatpush1.msra.mxu0 0.0
    %939 = vmatprep.subr.mxu0 0.0
    %940 = vmatpush1.msra.mxu0 0.0
    %941 = vmatprep.subr.mxu0 0.0
    %942 = vmatpush1.msra.mxu0 0.0
    %943 = vmatprep.subr.mxu0 0.0
    %944 = vmatpush1.msra.mxu0 0.0
    %945 = vmatprep.mubr.f32.mxu0 0.0
    %946 = vmatmul.mubr.f32.gmra.mrb[0].mxu0 %v798
    %v947 = vpop.f32.mrb[0].mxu0
    %v948 = vadd.f32 0.0, %v947
    %v949 = vpop.f32.mrb[0].mxu0
    %v950 = vadd.f32 0.0, %v949
    %951 = vdwg.mxu0
    %v952 = vadd.f32 %v806, %v877
    %v953 = vadd.f32 %v807, %v879
    %v954 = vadd.f32 %v808, %v948
    %v955 = vadd.f32 %v809, %v950
    %v956 = vxor.u32 %v952, 2147483648
    %v957 = vxor.u32 %v953, 2147483648
    %v958 = vxor.u32 %v954, 2147483648
    %v959 = vmul.f32 %v956, 1.442695
    %v960 = vpow.pop %v959
    %v961 = vmul.f32 %v957, 1.442695
    %v962 = vpow.pop %v961
    %v963 = vmul.f32 %v958, 1.442695
    %v964 = vpow.pop %v963
    %v965 = vadd.f32 %v960, 1.0
    %v966 = vadd.f32 %v962, 1.0
    %v967 = vadd.f32 %v964, 1.0
    %v968 = vrcp.pop %v965
    %v969 = vmul.f32 1.0, %v968
    %v970 = vrcp.pop %v966
    %v971 = vmul.f32 1.0, %v970
    %v972 = vrcp.pop %v967
    %v973 = vmul.f32 1.0, %v972
    %v974 = vtanh.pop %v955
    %v975 = vmul.f32 %v971, %v796
    %v976 = vmul.f32 %v969, %v974
    %v977 = vadd.f32 %v975, %v976
    %v978 = vtanh.pop %v977
    %v979 = vmul.f32 %v973, %v978
    %s980 = smul.u32 3, 4
    %s981 = smul.addr %s980, 8
    %s982 = scalar_lea.vmem [#allocation2], %s981
    %v983 = vld [vmem:[%s982] sm:$0xff]
    %v984 = vld [vmem:[%s982 + $0x8] sm:$0xff]
    %v985 = vld [vmem:[%s982 + $0x10] sm:$0xff]
    %v986 = vld [vmem:[%s982 + $0x18] sm:$0xff]
    %v987 = vadd.f32 %v983, %v363
    %v988 = vadd.f32 %v984, %v367
    %v989 = vadd.f32 %v985, %v371
    %v990 = vadd.f32 %v986, %v375
    %991 = vmatprep.subr.mxu0 %v385
    %992 = vmatpush1.msra.mxu0 %v384
    %993 = vmatprep.subr.mxu0 %v389
    %994 = vmatpush1.msra.mxu0 %v388
    %995 = vmatprep.subr.mxu0 %v393
    %996 = vmatpush1.msra.mxu0 %v392
    %997 = vmatprep.subr.mxu0 %v397
    %998 = vmatpush1.msra.mxu0 %v396
    %999 = vmatprep.subr.mxu0 %v401
    %1000 = vmatpush1.msra.mxu0 %v400
    %1001 = vmatprep.subr.mxu0 %v405
    %1002 = vmatpush1.msra.mxu0 %v404
    %1003 = vmatprep.subr.mxu0 %v409
    %1004 = vmatpush1.msra.mxu0 %v408
    %1005 = vmatprep.subr.mxu0 %v413
    %1006 = vmatpush1.msra.mxu0 %v412
    %1007 = vmatprep.subr.mxu0 %v417
    %1008 = vmatpush1.msra.mxu0 %v416
    %1009 = vmatprep.subr.mxu0 %v421
    %1010 = vmatpush1.msra.mxu0 %v420
    %1011 = vmatprep.subr.mxu0 %v425
    %1012 = vmatpush1.msra.mxu0 %v424
    %1013 = vmatprep.subr.mxu0 %v429
    %1014 = vmatpush1.msra.mxu0 %v428
    %1015 = vmatprep.subr.mxu0 %v433
    %1016 = vmatpush1.msra.mxu0 %v432
    %1017 = vmatprep.subr.mxu0 %v437
    %1018 = vmatpush1.msra.mxu0 %v436
    %1019 = vmatprep.subr.mxu0 %v441
    %1020 = vmatpush1.msra.mxu0 %v440
    %1021 = vmatprep.subr.mxu0 %v445
    %1022 = vmatpush1.msra.mxu0 %v444
    %1023 = vmatprep.subr.mxu0 0.0
    %1024 = vmatpush1.msra.mxu0 0.0
    %1025 = vmatprep.subr.mxu0 0.0
    %1026 = vmatpush1.msra.mxu0 0.0
    %1027 = vmatprep.subr.mxu0 0.0
    %1028 = vmatpush1.msra.mxu0 0.0
    %1029 = vmatprep.subr.mxu0 0.0
    %1030 = vmatpush1.msra.mxu0 0.0
    %1031 = vmatprep.subr.mxu0 0.0
    %1032 = vmatpush1.msra.mxu0 0.0
    %1033 = vmatprep.subr.mxu0 0.0
    %1034 = vmatpush1.msra.mxu0 0.0
    %1035 = vmatprep.subr.mxu0 0.0
    %1036 = vmatpush1.msra.mxu0 0.0
    %1037 = vmatprep.subr.mxu0 0.0
    %1038 = vmatpush1.msra.mxu0 0.0
    %1039 = vmatprep.subr.mxu0 0.0
    %1040 = vmatpush1.msra.mxu0 0.0
    %1041 = vmatprep.subr.mxu0 0.0
    %1042 = vmatpush1.msra.mxu0 0.0
    %1043 = vmatprep.subr.mxu0 0.0
    %1044 = vmatpush1.msra.mxu0 0.0
    %1045 = vmatprep.subr.mxu0 0.0
    %1046 = vmatpush1.msra.mxu0 0.0
    %1047 = vmatprep.subr.mxu0 0.0
    %1048 = vmatpush1.msra.mxu0 0.0
    %1049 = vmatprep.subr.mxu0 0.0
    %1050 = vmatpush1.msra.mxu0 0.0
    %1051 = vmatprep.subr.mxu0 0.0
    %1052 = vmatpush1.msra.mxu0 0.0
    %1053 = vmatprep.subr.mxu0 0.0
    %1054 = vmatpush1.msra.mxu0 0.0
    %1055 = vmatprep.mubr.f32.mxu0 0.0
    %1056 = vmatmul.mubr.f32.gmra.mrb[0].mxu0 %v979
    %v1057 = vpop.f32.mrb[0].mxu0
    %v1058 = vadd.f32 0.0, %v1057
    %v1059 = vpop.f32.mrb[0].mxu0
    %v1060 = vadd.f32 0.0, %v1059
    %1061 = vdwg.mxu0
    %1062 = vmatprep.subr.mxu0 %v387
    %1063 = vmatpush1.msra.mxu0 %v386
    %1064 = vmatprep.subr.mxu0 %v391
    %1065 = vmatpush1.msra.mxu0 %v390
    %1066 = vmatprep.subr.mxu0 %v395
    %1067 = vmatpush1.msra.mxu0 %v394
    %1068 = vmatprep.subr.mxu0 %v399
    %1069 = vmatpush1.msra.mxu0 %v398
    %1070 = vmatprep.subr.mxu0 %v403
    %1071 = vmatpush1.msra.mxu0 %v402
    %1072 = vmatprep.subr.mxu0 %v407
    %1073 = vmatpush1.msra.mxu0 %v406
    %1074 = vmatprep.subr.mxu0 %v411
    %1075 = vmatpush1.msra.mxu0 %v410
    %1076 = vmatprep.subr.mxu0 %v415
    %1077 = vmatpush1.msra.mxu0 %v414
    %1078 = vmatprep.subr.mxu0 %v419
    %1079 = vmatpush1.msra.mxu0 %v418
    %1080 = vmatprep.subr.mxu0 %v423
    %1081 = vmatpush1.msra.mxu0 %v422
    %1082 = vmatprep.subr.mxu0 %v427
    %1083 = vmatpush1.msra.mxu0 %v426
    %1084 = vmatprep.subr.mxu0 %v431
    %1085 = vmatpush1.msra.mxu0 %v430
    %1086 = vmatprep.subr.mxu0 %v435
    %1087 = vmatpush1.msra.mxu0 %v434
    %1088 = vmatprep.subr.mxu0 %v439
    %1089 = vmatpush1.msra.mxu0 %v438
    %1090 = vmatprep.subr.mxu0 %v443
    %1091 = vmatpush1.msra.mxu0 %v442
    %1092 = vmatprep.subr.mxu0 %v447
    %1093 = vmatpush1.msra.mxu0 %v446
    %1094 = vmatprep.subr.mxu0 0.0
    %1095 = vmatpush1.msra.mxu0 0.0
    %1096 = vmatprep.subr.mxu0 0.0
    %1097 = vmatpush1.msra.mxu0 0.0
    %1098 = vmatprep.subr.mxu0 0.0
    %1099 = vmatpush1.msra.mxu0 0.0
    %1100 = vmatprep.subr.mxu0 0.0
    %1101 = vmatpush1.msra.mxu0 0.0
    %1102 = vmatprep.subr.mxu0 0.0
    %1103 = vmatpush1.msra.mxu0 0.0
    %1104 = vmatprep.subr.mxu0 0.0
    %1105 = vmatpush1.msra.mxu0 0.0
    %1106 = vmatprep.subr.mxu0 0.0
    %1107 = vmatpush1.msra.mxu0 0.0
    %1108 = vmatprep.subr.mxu0 0.0
    %1109 = vmatpush1.msra.mxu0 0.0
    %1110 = vmatprep.subr.mxu0 0.0
    %1111 = vmatpush1.msra.mxu0 0.0
    %1112 = vmatprep.subr.mxu0 0.0
    %1113 = vmatpush1.msra.mxu0 0.0
    %1114 = vmatprep.subr.mxu0 0.0
    %1115 = vmatpush1.msra.mxu0 0.0
    %1116 = vmatprep.subr.mxu0 0.0
    %1117 = vmatpush1.msra.mxu0 0.0
    %1118 = vmatprep.subr.mxu0 0.0
    %1119 = vmatpush1.msra.mxu0 0.0
    %1120 = vmatprep.subr.mxu0 0.0
    %1121 = vmatpush1.msra.mxu0 0.0
    %1122 = vmatprep.subr.mxu0 0.0
    %1123 = vmatpush1.msra.mxu0 0.0
    %1124 = vmatprep.subr.mxu0 0.0
    %1125 = vmatpush1.msra.mxu0 0.0
    %1126 = vmatprep.mubr.f32.mxu0 0.0
    %1127 = vmatmul.mubr.f32.gmra.mrb[0].mxu0 %v979
    %v1128 = vpop.f32.mrb[0].mxu0
    %v1129 = vadd.f32 0.0, %v1128
    %v1130 = vpop.f32.mrb[0].mxu0
    %v1131 = vadd.f32 0.0, %v1130
    %1132 = vdwg.mxu0
    %v1133 = vadd.f32 %v987, %v1058
    %v1134 = vadd.f32 %v988, %v1060
    %v1135 = vadd.f32 %v989, %v1129
    %v1136 = vadd.f32 %v990, %v1131
    %v1137 = vxor.u32 %v1133, 2147483648
    %v1138 = vxor.u32 %v1134, 2147483648
    %v1139 = vxor.u32 %v1135, 2147483648
    %v1140 = vmul.f32 %v1137, 1.442695
    %v1141 = vpow.pop %v1140
    %v1142 = vmul.f32 %v1138, 1.442695
    %v1143 = vpow.pop %v1142
    %v1144 = vmul.f32 %v1139, 1.442695
    %v1145 = vpow.pop %v1144
    %v1146 = vadd.f32 %v1141, 1.0
    %v1147 = vadd.f32 %v1143, 1.0
    %v1148 = vadd.f32 %v1145, 1.0
    %v1149 = vrcp.pop %v1146
    %v1150 = vmul.f32 1.0, %v1149
    %v1151 = vrcp.pop %v1147
    %v1152 = vmul.f32 1.0, %v1151
    %v1153 = vrcp.pop %v1148
    %v1154 = vmul.f32 1.0, %v1153
    %v1155 = vtanh.pop %v1136
    %v1156 = vmul.f32 %v1152, %v977
    %v1157 = vmul.f32 %v1150, %v1155
    %v1158 = vadd.f32 %v1156, %v1157
    %v1159 = vtanh.pop %v1158
    %v1160 = vmul.f32 %v1154, %v1159
    %s1161 = smul.u32 4, 4
    %s1162 = smul.addr %s1161, 8
    %s1163 = scalar_lea.vmem [#allocation2], %s1162
    %v1164 = vld [vmem:[%s1163] sm:$0xff]
    %v1165 = vld [vmem:[%s1163 + $0x8] sm:$0xff]
    %v1166 = vld [vmem:[%s1163 + $0x10] sm:$0xff]
    %v1167 = vld [vmem:[%s1163 + $0x18] sm:$0xff]
    %v1168 = vadd.f32 %v1164, %v363
    %v1169 = vadd.f32 %v1165, %v367
    %v1170 = vadd.f32 %v1166, %v371
    %v1171 = vadd.f32 %v1167, %v375
    %1172 = vmatprep.subr.mxu0 %v385
    %1173 = vmatpush1.msra.mxu0 %v384
    %1174 = vmatprep.subr.mxu0 %v389
    %1175 = vmatpush1.msra.mxu0 %v388
    %1176 = vmatprep.subr.mxu0 %v393
    %1177 = vmatpush1.msra.mxu0 %v392
    %1178 = vmatprep.subr.mxu0 %v397
    %1179 = vmatpush1.msra.mxu0 %v396
    %1180 = vmatprep.subr.mxu0 %v401
    %1181 = vmatpush1.msra.mxu0 %v400
    %1182 = vmatprep.subr.mxu0 %v405
    %1183 = vmatpush1.msra.mxu0 %v404
    %1184 = vmatprep.subr.mxu0 %v409
    %1185 = vmatpush1.msra.mxu0 %v408
    %1186 = vmatprep.subr.mxu0 %v413
    %1187 = vmatpush1.msra.mxu0 %v412
    %1188 = vmatprep.subr.mxu0 %v417
    %1189 = vmatpush1.msra.mxu0 %v416
    %1190 = vmatprep.subr.mxu0 %v421
    %1191 = vmatpush1.msra.mxu0 %v420
    %1192 = vmatprep.subr.mxu0 %v425
    %1193 = vmatpush1.msra.mxu0 %v424
    %1194 = vmatprep.subr.mxu0 %v429
    %1195 = vmatpush1.msra.mxu0 %v428
    %1196 = vmatprep.subr.mxu0 %v433
    %1197 = vmatpush1.msra.mxu0 %v432
    %1198 = vmatprep.subr.mxu0 %v437
    %1199 = vmatpush1.msra.mxu0 %v436
    %1200 = vmatprep.subr.mxu0 %v441
    %1201 = vmatpush1.msra.mxu0 %v440
    %1202 = vmatprep.subr.mxu0 %v445
    %1203 = vmatpush1.msra.mxu0 %v444
    %1204 = vmatprep.subr.mxu0 0.0
    %1205 = vmatpush1.msra.mxu0 0.0
    %1206 = vmatprep.subr.mxu0 0.0
    %1207 = vmatpush1.msra.mxu0 0.0
    %1208 = vmatprep.subr.mxu0 0.0
    %1209 = vmatpush1.msra.mxu0 0.0
    %1210 = vmatprep.subr.mxu0 0.0
    %1211 = vmatpush1.msra.mxu0 0.0
    %1212 = vmatprep.subr.mxu0 0.0
    %1213 = vmatpush1.msra.mxu0 0.0
    %1214 = vmatprep.subr.mxu0 0.0
    %1215 = vmatpush1.msra.mxu0 0.0
    %1216 = vmatprep.subr.mxu0 0.0
    %1217 = vmatpush1.msra.mxu0 0.0
    %1218 = vmatprep.subr.mxu0 0.0
    %1219 = vmatpush1.msra.mxu0 0.0
    %1220 = vmatprep.subr.mxu0 0.0
    %1221 = vmatpush1.msra.mxu0 0.0
    %1222 = vmatprep.subr.mxu0 0.0
    %1223 = vmatpush1.msra.mxu0 0.0
    %1224 = vmatprep.subr.mxu0 0.0
    %1225 = vmatpush1.msra.mxu0 0.0
    %1226 = vmatprep.subr.mxu0 0.0
    %1227 = vmatpush1.msra.mxu0 0.0
    %1228 = vmatprep.subr.mxu0 0.0
    %1229 = vmatpush1.msra.mxu0 0.0
    %1230 = vmatprep.subr.mxu0 0.0
    %1231 = vmatpush1.msra.mxu0 0.0
    %1232 = vmatprep.subr.mxu0 0.0
    %1233 = vmatpush1.msra.mxu0 0.0
    %1234 = vmatprep.subr.mxu0 0.0
    %1235 = vmatpush1.msra.mxu0 0.0
    %1236 = vmatprep.mubr.f32.mxu0 0.0
    %1237 = vmatmul.mubr.f32.gmra.mrb[0].mxu0 %v1160
    %v1238 = vpop.f32.mrb[0].mxu0
    %v1239 = vadd.f32 0.0, %v1238
    %v1240 = vpop.f32.mrb[0].mxu0
    %v1241 = vadd.f32 0.0, %v1240
    %1242 = vdwg.mxu0
    %1243 = vmatprep.subr.mxu0 %v387
    %1244 = vmatpush1.msra.mxu0 %v386
    %1245 = vmatprep.subr.mxu0 %v391
    %1246 = vmatpush1.msra.mxu0 %v390
    %1247 = vmatprep.subr.mxu0 %v395
    %1248 = vmatpush1.msra.mxu0 %v394
    %1249 = vmatprep.subr.mxu0 %v399
    %1250 = vmatpush1.msra.mxu0 %v398
    %1251 = vmatprep.subr.mxu0 %v403
    %1252 = vmatpush1.msra.mxu0 %v402
    %1253 = vmatprep.subr.mxu0 %v407
    %1254 = vmatpush1.msra.mxu0 %v406
    %1255 = vmatprep.subr.mxu0 %v411
    %1256 = vmatpush1.msra.mxu0 %v410
    %1257 = vmatprep.subr.mxu0 %v415
    %1258 = vmatpush1.msra.mxu0 %v414
    %1259 = vmatprep.subr.mxu0 %v419
    %1260 = vmatpush1.msra.mxu0 %v418
    %1261 = vmatprep.subr.mxu0 %v423
    %1262 = vmatpush1.msra.mxu0 %v422
    %1263 = vmatprep.subr.mxu0 %v427
    %1264 = vmatpush1.msra.mxu0 %v426
    %1265 = vmatprep.subr.mxu0 %v431
    %1266 = vmatpush1.msra.mxu0 %v430
    %1267 = vmatprep.subr.mxu0 %v435
    %1268 = vmatpush1.msra.mxu0 %v434
    %1269 = vmatprep.subr.mxu0 %v439
    %1270 = vmatpush1.msra.mxu0 %v438
    %1271 = vmatprep.subr.mxu0 %v443
    %1272 = vmatpush1.msra.mxu0 %v442
    %1273 = vmatprep.subr.mxu0 %v447
    %1274 = vmatpush1.msra.mxu0 %v446
    %1275 = vmatprep.subr.mxu0 0.0
    %1276 = vmatpush1.msra.mxu0 0.0
    %1277 = vmatprep.subr.mxu0 0.0
    %1278 = vmatpush1.msra.mxu0 0.0
    %1279 = vmatprep.subr.mxu0 0.0
    %1280 = vmatpush1.msra.mxu0 0.0
    %1281 = vmatprep.subr.mxu0 0.0
    %1282 = vmatpush1.msra.mxu0 0.0
    %1283 = vmatprep.subr.mxu0 0.0
    %1284 = vmatpush1.msra.mxu0 0.0
    %1285 = vmatprep.subr.mxu0 0.0
    %1286 = vmatpush1.msra.mxu0 0.0
    %1287 = vmatprep.subr.mxu0 0.0
    %1288 = vmatpush1.msra.mxu0 0.0
    %1289 = vmatprep.subr.mxu0 0.0
    %1290 = vmatpush1.msra.mxu0 0.0
    %1291 = vmatprep.subr.mxu0 0.0
    %1292 = vmatpush1.msra.mxu0 0.0
    %1293 = vmatprep.subr.mxu0 0.0
    %1294 = vmatpush1.msra.mxu0 0.0
    %1295 = vmatprep.subr.mxu0 0.0
    %1296 = vmatpush1.msra.mxu0 0.0
    %1297 = vmatprep.subr.mxu0 0.0
    %1298 = vmatpush1.msra.mxu0 0.0
    %1299 = vmatprep.subr.mxu0 0.0
    %1300 = vmatpush1.msra.mxu0 0.0
    %1301 = vmatprep.subr.mxu0 0.0
    %1302 = vmatpush1.msra.mxu0 0.0
    %1303 = vmatprep.subr.mxu0 0.0
    %1304 = vmatpush1.msra.mxu0 0.0
    %1305 = vmatprep.subr.mxu0 0.0
    %1306 = vmatpush1.msra.mxu0 0.0
    %1307 = vmatprep.mubr.f32.mxu0 0.0
    %1308 = vmatmul.mubr.f32.gmra.mrb[0].mxu0 %v1160
    %v1309 = vpop.f32.mrb[0].mxu0
    %v1310 = vadd.f32 0.0, %v1309
    %v1311 = vpop.f32.mrb[0].mxu0
    %v1312 = vadd.f32 0.0, %v1311
    %1313 = vdwg.mxu0
    %v1314 = vadd.f32 %v1168, %v1239
    %v1315 = vadd.f32 %v1169, %v1241
    %v1316 = vadd.f32 %v1170, %v1310
    %v1317 = vadd.f32 %v1171, %v1312
    %v1318 = vxor.u32 %v1314, 2147483648
    %v1319 = vxor.u32 %v1315, 2147483648
    %v1320 = vxor.u32 %v1316, 2147483648
    %v1321 = vmul.f32 %v1318, 1.442695
    %v1322 = vpow.pop %v1321
    %v1323 = vmul.f32 %v1319, 1.442695
    %v1324 = vpow.pop %v1323
    %v1325 = vmul.f32 %v1320, 1.442695
    %v1326 = vpow.pop %v1325
    %v1327 = vadd.f32 %v1322, 1.0
    %v1328 = vadd.f32 %v1324, 1.0
    %v1329 = vadd.f32 %v1326, 1.0
    %v1330 = vrcp.pop %v1327
    %v1331 = vmul.f32 1.0, %v1330
    %v1332 = vrcp.pop %v1328
    %v1333 = vmul.f32 1.0, %v1332
    %v1334 = vrcp.pop %v1329
    %v1335 = vmul.f32 1.0, %v1334
    %v1336 = vtanh.pop %v1317
    %v1337 = vmul.f32 %v1333, %v1158
    %v1338 = vmul.f32 %v1331, %v1336
    %v1339 = vadd.f32 %v1337, %v1338
    %v1340 = vtanh.pop %v1339
    %v1341 = vmul.f32 %v1335, %v1340
    %s1342 = smul.u32 5, 4
    %s1343 = smul.addr %s1342, 8
    %s1344 = scalar_lea.vmem [#allocation2], %s1343
    %v1345 = vld [vmem:[%s1344] sm:$0xff]
    %v1346 = vld [vmem:[%s1344 + $0x8] sm:$0xff]
    %v1347 = vld [vmem:[%s1344 + $0x10] sm:$0xff]
    %v1348 = vld [vmem:[%s1344 + $0x18] sm:$0xff]
    %v1349 = vadd.f32 %v1345, %v363
    %v1350 = vadd.f32 %v1346, %v367
    %v1351 = vadd.f32 %v1347, %v371
    %v1352 = vadd.f32 %v1348, %v375
    %1353 = vmatprep.subr.mxu0 %v385
    %1354 = vmatpush1.msra.mxu0 %v384
    %1355 = vmatprep.subr.mxu0 %v389
    %1356 = vmatpush1.msra.mxu0 %v388
    %1357 = vmatprep.subr.mxu0 %v393
    %1358 = vmatpush1.msra.mxu0 %v392
    %1359 = vmatprep.subr.mxu0 %v397
    %1360 = vmatpush1.msra.mxu0 %v396
    %1361 = vmatprep.subr.mxu0 %v401
    %1362 = vmatpush1.msra.mxu0 %v400
    %1363 = vmatprep.subr.mxu0 %v405
    %1364 = vmatpush1.msra.mxu0 %v404
    %1365 = vmatprep.subr.mxu0 %v409
    %1366 = vmatpush1.msra.mxu0 %v408
    %1367 = vmatprep.subr.mxu0 %v413
    %1368 = vmatpush1.msra.mxu0 %v412
    %1369 = vmatprep.subr.mxu0 %v417
    %1370 = vmatpush1.msra.mxu0 %v416
    %1371 = vmatprep.subr.mxu0 %v421
    %1372 = vmatpush1.msra.mxu0 %v420
    %1373 = vmatprep.subr.mxu0 %v425
    %1374 = vmatpush1.msra.mxu0 %v424
    %1375 = vmatprep.subr.mxu0 %v429
    %1376 = vmatpush1.msra.mxu0 %v428
    %1377 = vmatprep.subr.mxu0 %v433
    %1378 = vmatpush1.msra.mxu0 %v432
    %1379 = vmatprep.subr.mxu0 %v437
    %1380 = vmatpush1.msra.mxu0 %v436
    %1381 = vmatprep.subr.mxu0 %v441
    %1382 = vmatpush1.msra.mxu0 %v440
    %1383 = vmatprep.subr.mxu0 %v445
    %1384 = vmatpush1.msra.mxu0 %v444
    %1385 = vmatprep.subr.mxu0 0.0
    %1386 = vmatpush1.msra.mxu0 0.0
    %1387 = vmatprep.subr.mxu0 0.0
    %1388 = vmatpush1.msra.mxu0 0.0
    %1389 = vmatprep.subr.mxu0 0.0
    %1390 = vmatpush1.msra.mxu0 0.0
    %1391 = vmatprep.subr.mxu0 0.0
    %1392 = vmatpush1.msra.mxu0 0.0
    %1393 = vmatprep.subr.mxu0 0.0
    %1394 = vmatpush1.msra.mxu0 0.0
    %1395 = vmatprep.subr.mxu0 0.0
    %1396 = vmatpush1.msra.mxu0 0.0
    %1397 = vmatprep.subr.mxu0 0.0
    %1398 = vmatpush1.msra.mxu0 0.0
    %1399 = vmatprep.subr.mxu0 0.0
    %1400 = vmatpush1.msra.mxu0 0.0
    %1401 = vmatprep.subr.mxu0 0.0
    %1402 = vmatpush1.msra.mxu0 0.0
    %1403 = vmatprep.subr.mxu0 0.0
    %1404 = vmatpush1.msra.mxu0 0.0
    %1405 = vmatprep.subr.mxu0 0.0
    %1406 = vmatpush1.msra.mxu0 0.0
    %1407 = vmatprep.subr.mxu0 0.0
    %1408 = vmatpush1.msra.mxu0 0.0
    %1409 = vmatprep.subr.mxu0 0.0
    %1410 = vmatpush1.msra.mxu0 0.0
    %1411 = vmatprep.subr.mxu0 0.0
    %1412 = vmatpush1.msra.mxu0 0.0
    %1413 = vmatprep.subr.mxu0 0.0
    %1414 = vmatpush1.msra.mxu0 0.0
    %1415 = vmatprep.subr.mxu0 0.0
    %1416 = vmatpush1.msra.mxu0 0.0
    %1417 = vmatprep.mubr.f32.mxu0 0.0
    %1418 = vmatmul.mubr.f32.gmra.mrb[0].mxu0 %v1341
    %v1419 = vpop.f32.mrb[0].mxu0
    %v1420 = vadd.f32 0.0, %v1419
    %v1421 = vpop.f32.mrb[0].mxu0
    %v1422 = vadd.f32 0.0, %v1421
    %1423 = vdwg.mxu0
    %1424 = vmatprep.subr.mxu0 %v387
    %1425 = vmatpush1.msra.mxu0 %v386
    %1426 = vmatprep.subr.mxu0 %v391
    %1427 = vmatpush1.msra.mxu0 %v390
    %1428 = vmatprep.subr.mxu0 %v395
    %1429 = vmatpush1.msra.mxu0 %v394
    %1430 = vmatprep.subr.mxu0 %v399
    %1431 = vmatpush1.msra.mxu0 %v398
    %1432 = vmatprep.subr.mxu0 %v403
    %1433 = vmatpush1.msra.mxu0 %v402
    %1434 = vmatprep.subr.mxu0 %v407
    %1435 = vmatpush1.msra.mxu0 %v406
    %1436 = vmatprep.subr.mxu0 %v411
    %1437 = vmatpush1.msra.mxu0 %v410
    %1438 = vmatprep.subr.mxu0 %v415
    %1439 = vmatpush1.msra.mxu0 %v414
    %1440 = vmatprep.subr.mxu0 %v419
    %1441 = vmatpush1.msra.mxu0 %v418
    %1442 = vmatprep.subr.mxu0 %v423
    %1443 = vmatpush1.msra.mxu0 %v422
    %1444 = vmatprep.subr.mxu0 %v427
    %1445 = vmatpush1.msra.mxu0 %v426
    %1446 = vmatprep.subr.mxu0 %v431
    %1447 = vmatpush1.msra.mxu0 %v430
    %1448 = vmatprep.subr.mxu0 %v435
    %1449 = vmatpush1.msra.mxu0 %v434
    %1450 = vmatprep.subr.mxu0 %v439
    %1451 = vmatpush1.msra.mxu0 %v438
    %1452 = vmatprep.subr.mxu0 %v443
    %1453 = vmatpush1.msra.mxu0 %v442
    %1454 = vmatprep.subr.mxu0 %v447
    %1455 = vmatpush1.msra.mxu0 %v446
    %1456 = vmatprep.subr.mxu0 0.0
    %1457 = vmatpush1.msra.mxu0 0.0
    %1458 = vmatprep.subr.mxu0 0.0
    %1459 = vmatpush1.msra.mxu0 0.0
    %1460 = vmatprep.subr.mxu0 0.0
    %1461 = vmatpush1.msra.mxu0 0.0
    %1462 = vmatprep.subr.mxu0 0.0
    %1463 = vmatpush1.msra.mxu0 0.0
    %1464 = vmatprep.subr.mxu0 0.0
    %1465 = vmatpush1.msra.mxu0 0.0
    %1466 = vmatprep.subr.mxu0 0.0
    %1467 = vmatpush1.msra.mxu0 0.0
    %1468 = vmatprep.subr.mxu0 0.0
    %1469 = vmatpush1.msra.mxu0 0.0
    %1470 = vmatprep.subr.mxu0 0.0
    %1471 = vmatpush1.msra.mxu0 0.0
    %1472 = vmatprep.subr.mxu0 0.0
    %1473 = vmatpush1.msra.mxu0 0.0
    %1474 = vmatprep.subr.mxu0 0.0
    %1475 = vmatpush1.msra.mxu0 0.0
    %1476 = vmatprep.subr.mxu0 0.0
    %1477 = vmatpush1.msra.mxu0 0.0
    %1478 = vmatprep.subr.mxu0 0.0
    %1479 = vmatpush1.msra.mxu0 0.0
    %1480 = vmatprep.subr.mxu0 0.0
    %1481 = vmatpush1.msra.mxu0 0.0
    %1482 = vmatprep.subr.mxu0 0.0
    %1483 = vmatpush1.msra.mxu0 0.0
    %1484 = vmatprep.subr.mxu0 0.0
    %1485 = vmatpush1.msra.mxu0 0.0
    %1486 = vmatprep.subr.mxu0 0.0
    %1487 = vmatpush1.msra.mxu0 0.0
    %1488 = vmatprep.mubr.f32.mxu0 0.0
    %1489 = vmatmul.mubr.f32.gmra.mrb[0].mxu0 %v1341
    %v1490 = vpop.f32.mrb[0].mxu0
    %v1491 = vadd.f32 0.0, %v1490
    %v1492 = vpop.f32.mrb[0].mxu0
    %v1493 = vadd.f32 0.0, %v1492
    %1494 = vdwg.mxu0
    %v1495 = vadd.f32 %v1349, %v1420
    %v1496 = vadd.f32 %v1350, %v1422
    %v1497 = vadd.f32 %v1351, %v1491
    %v1498 = vadd.f32 %v1352, %v1493
    %v1499 = vxor.u32 %v1495, 2147483648
    %v1500 = vxor.u32 %v1496, 2147483648
    %v1501 = vxor.u32 %v1497, 2147483648
    %v1502 = vmul.f32 %v1499, 1.442695
    %v1503 = vpow.pop %v1502
    %v1504 = vmul.f32 %v1500, 1.442695
    %v1505 = vpow.pop %v1504
    %v1506 = vmul.f32 %v1501, 1.442695
    %v1507 = vpow.pop %v1506
    %v1508 = vadd.f32 %v1503, 1.0
    %v1509 = vadd.f32 %v1505, 1.0
    %v1510 = vadd.f32 %v1507, 1.0
    %v1511 = vrcp.pop %v1508
    %v1512 = vmul.f32 1.0, %v1511
    %v1513 = vrcp.pop %v1509
    %v1514 = vmul.f32 1.0, %v1513
    %v1515 = vrcp.pop %v1510
    %v1516 = vmul.f32 1.0, %v1515
    %v1517 = vtanh.pop %v1498
    %v1518 = vmul.f32 %v1514, %v1339
    %v1519 = vmul.f32 %v1512, %v1517
    %v1520 = vadd.f32 %v1518, %v1519
    %v1521 = vtanh.pop %v1520
    %v1522 = vmul.f32 %v1516, %v1521
    %s1523 = smul.u32 6, 4
    %s1524 = smul.addr %s1523, 8
    %s1525 = scalar_lea.vmem [#allocation2], %s1524
    %v1526 = vld [vmem:[%s1525] sm:$0xff]
    %v1527 = vld [vmem:[%s1525 + $0x8] sm:$0xff]
    %v1528 = vld [vmem:[%s1525 + $0x10] sm:$0xff]
    %v1529 = vld [vmem:[%s1525 + $0x18] sm:$0xff]
    %v1530 = vadd.f32 %v1526, %v363
    %v1531 = vadd.f32 %v1527, %v367
    %v1532 = vadd.f32 %v1528, %v371
    %v1533 = vadd.f32 %v1529, %v375
    %1534 = vmatprep.subr.mxu0 %v385
    %1535 = vmatpush1.msra.mxu0 %v384
    %1536 = vmatprep.subr.mxu0 %v389
    %1537 = vmatpush1.msra.mxu0 %v388
    %1538 = vmatprep.subr.mxu0 %v393
    %1539 = vmatpush1.msra.mxu0 %v392
    %1540 = vmatprep.subr.mxu0 %v397
    %1541 = vmatpush1.msra.mxu0 %v396
    %1542 = vmatprep.subr.mxu0 %v401
    %1543 = vmatpush1.msra.mxu0 %v400
    %1544 = vmatprep.subr.mxu0 %v405
    %1545 = vmatpush1.msra.mxu0 %v404
    %1546 = vmatprep.subr.mxu0 %v409
    %1547 = vmatpush1.msra.mxu0 %v408
    %1548 = vmatprep.subr.mxu0 %v413
    %1549 = vmatpush1.msra.mxu0 %v412
    %1550 = vmatprep.subr.mxu0 %v417
    %1551 = vmatpush1.msra.mxu0 %v416
    %1552 = vmatprep.subr.mxu0 %v421
    %1553 = vmatpush1.msra.mxu0 %v420
    %1554 = vmatprep.subr.mxu0 %v425
    %1555 = vmatpush1.msra.mxu0 %v424
    %1556 = vmatprep.subr.mxu0 %v429
    %1557 = vmatpush1.msra.mxu0 %v428
    %1558 = vmatprep.subr.mxu0 %v433
    %1559 = vmatpush1.msra.mxu0 %v432
    %1560 = vmatprep.subr.mxu0 %v437
    %1561 = vmatpush1.msra.mxu0 %v436
    %1562 = vmatprep.subr.mxu0 %v441
    %1563 = vmatpush1.msra.mxu0 %v440
    %1564 = vmatprep.subr.mxu0 %v445
    %1565 = vmatpush1.msra.mxu0 %v444
    %1566 = vmatprep.subr.mxu0 0.0
    %1567 = vmatpush1.msra.mxu0 0.0
    %1568 = vmatprep.subr.mxu0 0.0
    %1569 = vmatpush1.msra.mxu0 0.0
    %1570 = vmatprep.subr.mxu0 0.0
    %1571 = vmatpush1.msra.mxu0 0.0
    %1572 = vmatprep.subr.mxu0 0.0
    %1573 = vmatpush1.msra.mxu0 0.0
    %1574 = vmatprep.subr.mxu0 0.0
    %1575 = vmatpush1.msra.mxu0 0.0
    %1576 = vmatprep.subr.mxu0 0.0
    %1577 = vmatpush1.msra.mxu0 0.0
    %1578 = vmatprep.subr.mxu0 0.0
    %1579 = vmatpush1.msra.mxu0 0.0
    %1580 = vmatprep.subr.mxu0 0.0
    %1581 = vmatpush1.msra.mxu0 0.0
    %1582 = vmatprep.subr.mxu0 0.0
    %1583 = vmatpush1.msra.mxu0 0.0
    %1584 = vmatprep.subr.mxu0 0.0
    %1585 = vmatpush1.msra.mxu0 0.0
    %1586 = vmatprep.subr.mxu0 0.0
    %1587 = vmatpush1.msra.mxu0 0.0
    %1588 = vmatprep.subr.mxu0 0.0
    %1589 = vmatpush1.msra.mxu0 0.0
    %1590 = vmatprep.subr.mxu0 0.0
    %1591 = vmatpush1.msra.mxu0 0.0
    %1592 = vmatprep.subr.mxu0 0.0
    %1593 = vmatpush1.msra.mxu0 0.0
    %1594 = vmatprep.subr.mxu0 0.0
    %1595 = vmatpush1.msra.mxu0 0.0
    %1596 = vmatprep.subr.mxu0 0.0
    %1597 = vmatpush1.msra.mxu0 0.0
    %1598 = vmatprep.mubr.f32.mxu0 0.0
    %1599 = vmatmul.mubr.f32.gmra.mrb[0].mxu0 %v1522
    %v1600 = vpop.f32.mrb[0].mxu0
    %v1601 = vadd.f32 0.0, %v1600
    %v1602 = vpop.f32.mrb[0].mxu0
    %v1603 = vadd.f32 0.0, %v1602
    %1604 = vdwg.mxu0
    %1605 = vmatprep.subr.mxu0 %v387
    %1606 = vmatpush1.msra.mxu0 %v386
    %1607 = vmatprep.subr.mxu0 %v391
    %1608 = vmatpush1.msra.mxu0 %v390
    %1609 = vmatprep.subr.mxu0 %v395
    %1610 = vmatpush1.msra.mxu0 %v394
    %1611 = vmatprep.subr.mxu0 %v399
    %1612 = vmatpush1.msra.mxu0 %v398
    %1613 = vmatprep.subr.mxu0 %v403
    %1614 = vmatpush1.msra.mxu0 %v402
    %1615 = vmatprep.subr.mxu0 %v407
    %1616 = vmatpush1.msra.mxu0 %v406
    %1617 = vmatprep.subr.mxu0 %v411
    %1618 = vmatpush1.msra.mxu0 %v410
    %1619 = vmatprep.subr.mxu0 %v415
    %1620 = vmatpush1.msra.mxu0 %v414
    %1621 = vmatprep.subr.mxu0 %v419
    %1622 = vmatpush1.msra.mxu0 %v418
    %1623 = vmatprep.subr.mxu0 %v423
    %1624 = vmatpush1.msra.mxu0 %v422
    %1625 = vmatprep.subr.mxu0 %v427
    %1626 = vmatpush1.msra.mxu0 %v426
    %1627 = vmatprep.subr.mxu0 %v431
    %1628 = vmatpush1.msra.mxu0 %v430
    %1629 = vmatprep.subr.mxu0 %v435
    %1630 = vmatpush1.msra.mxu0 %v434
    %1631 = vmatprep.subr.mxu0 %v439
    %1632 = vmatpush1.msra.mxu0 %v438
    %1633 = vmatprep.subr.mxu0 %v443
    %1634 = vmatpush1.msra.mxu0 %v442
    %1635 = vmatprep.subr.mxu0 %v447
    %1636 = vmatpush1.msra.mxu0 %v446
    %1637 = vmatprep.subr.mxu0 0.0
    %1638 = vmatpush1.msra.mxu0 0.0
    %1639 = vmatprep.subr.mxu0 0.0
    %1640 = vmatpush1.msra.mxu0 0.0
    %1641 = vmatprep.subr.mxu0 0.0
    %1642 = vmatpush1.msra.mxu0 0.0
    %1643 = vmatprep.subr.mxu0 0.0
    %1644 = vmatpush1.msra.mxu0 0.0
    %1645 = vmatprep.subr.mxu0 0.0
    %1646 = vmatpush1.msra.mxu0 0.0
    %1647 = vmatprep.subr.mxu0 0.0
    %1648 = vmatpush1.msra.mxu0 0.0
    %1649 = vmatprep.subr.mxu0 0.0
    %1650 = vmatpush1.msra.mxu0 0.0
    %1651 = vmatprep.subr.mxu0 0.0
    %1652 = vmatpush1.msra.mxu0 0.0
    %1653 = vmatprep.subr.mxu0 0.0
    %1654 = vmatpush1.msra.mxu0 0.0
    %1655 = vmatprep.subr.mxu0 0.0
    %1656 = vmatpush1.msra.mxu0 0.0
    %1657 = vmatprep.subr.mxu0 0.0
    %1658 = vmatpush1.msra.mxu0 0.0
    %1659 = vmatprep.subr.mxu0 0.0
    %1660 = vmatpush1.msra.mxu0 0.0
    %1661 = vmatprep.subr.mxu0 0.0
    %1662 = vmatpush1.msra.mxu0 0.0
    %1663 = vmatprep.subr.mxu0 0.0
    %1664 = vmatpush1.msra.mxu0 0.0
    %1665 = vmatprep.subr.mxu0 0.0
    %1666 = vmatpush1.msra.mxu0 0.0
    %1667 = vmatprep.subr.mxu0 0.0
    %1668 = vmatpush1.msra.mxu0 0.0
    %1669 = vmatprep.mubr.f32.mxu0 0.0
    %1670 = vmatmul.mubr.f32.gmra.mrb[0].mxu0 %v1522
    %v1671 = vpop.f32.mrb[0].mxu0
    %v1672 = vadd.f32 0.0, %v1671
    %v1673 = vpop.f32.mrb[0].mxu0
    %v1674 = vadd.f32 0.0, %v1673
    %1675 = vdwg.mxu0
    %v1676 = vadd.f32 %v1530, %v1601
    %v1677 = vadd.f32 %v1531, %v1603
    %v1678 = vadd.f32 %v1532, %v1672
    %v1679 = vadd.f32 %v1533, %v1674
    %v1680 = vxor.u32 %v1676, 2147483648
    %v1681 = vxor.u32 %v1677, 2147483648
    %v1682 = vxor.u32 %v1678, 2147483648
    %v1683 = vmul.f32 %v1680, 1.442695
    %v1684 = vpow.pop %v1683
    %v1685 = vmul.f32 %v1681, 1.442695
    %v1686 = vpow.pop %v1685
    %v1687 = vmul.f32 %v1682, 1.442695
    %v1688 = vpow.pop %v1687
    %v1689 = vadd.f32 %v1684, 1.0
    %v1690 = vadd.f32 %v1686, 1.0
    %v1691 = vadd.f32 %v1688, 1.0
    %v1692 = vrcp.pop %v1689
    %v1693 = vmul.f32 1.0, %v1692
    %v1694 = vrcp.pop %v1690
    %v1695 = vmul.f32 1.0, %v1694
    %v1696 = vrcp.pop %v1691
    %v1697 = vmul.f32 1.0, %v1696
    %v1698 = vtanh.pop %v1679
    %v1699 = vmul.f32 %v1695, %v1520
    %v1700 = vmul.f32 %v1693, %v1698
    %v1701 = vadd.f32 %v1699, %v1700
    %v1702 = vtanh.pop %v1701
    %v1703 = vmul.f32 %v1697, %v1702
    %s1704 = smul.u32 7, 4
    %s1705 = smul.addr %s1704, 8
    %s1706 = scalar_lea.vmem [#allocation2], %s1705
    %v1707 = vld [vmem:[%s1706] sm:$0xff]
    %v1708 = vld [vmem:[%s1706 + $0x8] sm:$0xff]
    %v1709 = vld [vmem:[%s1706 + $0x10] sm:$0xff]
    %v1710 = vld [vmem:[%s1706 + $0x18] sm:$0xff]
    %v1711 = vadd.f32 %v1707, %v363
    %v1712 = vadd.f32 %v1708, %v367
    %v1713 = vadd.f32 %v1709, %v371
    %v1714 = vadd.f32 %v1710, %v375
    %1715 = vmatprep.subr.mxu0 %v385
    %1716 = vmatpush1.msra.mxu0 %v384
    %1717 = vmatprep.subr.mxu0 %v389
    %1718 = vmatpush1.msra.mxu0 %v388
    %1719 = vmatprep.subr.mxu0 %v393
    %1720 = vmatpush1.msra.mxu0 %v392
    %1721 = vmatprep.subr.mxu0 %v397
    %1722 = vmatpush1.msra.mxu0 %v396
    %1723 = vmatprep.subr.mxu0 %v401
    %1724 = vmatpush1.msra.mxu0 %v400
    %1725 = vmatprep.subr.mxu0 %v405
    %1726 = vmatpush1.msra.mxu0 %v404
    %1727 = vmatprep.subr.mxu0 %v409
    %1728 = vmatpush1.msra.mxu0 %v408
    %1729 = vmatprep.subr.mxu0 %v413
    %1730 = vmatpush1.msra.mxu0 %v412
    %1731 = vmatprep.subr.mxu0 %v417
    %1732 = vmatpush1.msra.mxu0 %v416
    %1733 = vmatprep.subr.mxu0 %v421
    %1734 = vmatpush1.msra.mxu0 %v420
    %1735 = vmatprep.subr.mxu0 %v425
    %1736 = vmatpush1.msra.mxu0 %v424
    %1737 = vmatprep.subr.mxu0 %v429
    %1738 = vmatpush1.msra.mxu0 %v428
    %1739 = vmatprep.subr.mxu0 %v433
    %1740 = vmatpush1.msra.mxu0 %v432
    %1741 = vmatprep.subr.mxu0 %v437
    %1742 = vmatpush1.msra.mxu0 %v436
    %1743 = vmatprep.subr.mxu0 %v441
    %1744 = vmatpush1.msra.mxu0 %v440
    %1745 = vmatprep.subr.mxu0 %v445
    %1746 = vmatpush1.msra.mxu0 %v444
    %1747 = vmatprep.subr.mxu0 0.0
    %1748 = vmatpush1.msra.mxu0 0.0
    %1749 = vmatprep.subr.mxu0 0.0
    %1750 = vmatpush1.msra.mxu0 0.0
    %1751 = vmatprep.subr.mxu0 0.0
    %1752 = vmatpush1.msra.mxu0 0.0
    %1753 = vmatprep.subr.mxu0 0.0
    %1754 = vmatpush1.msra.mxu0 0.0
    %1755 = vmatprep.subr.mxu0 0.0
    %1756 = vmatpush1.msra.mxu0 0.0
    %1757 = vmatprep.subr.mxu0 0.0
    %1758 = vmatpush1.msra.mxu0 0.0
    %1759 = vmatprep.subr.mxu0 0.0
    %1760 = vmatpush1.msra.mxu0 0.0
    %1761 = vmatprep.subr.mxu0 0.0
    %1762 = vmatpush1.msra.mxu0 0.0
    %1763 = vmatprep.subr.mxu0 0.0
    %1764 = vmatpush1.msra.mxu0 0.0
    %1765 = vmatprep.subr.mxu0 0.0
    %1766 = vmatpush1.msra.mxu0 0.0
    %1767 = vmatprep.subr.mxu0 0.0
    %1768 = vmatpush1.msra.mxu0 0.0
    %1769 = vmatprep.subr.mxu0 0.0
    %1770 = vmatpush1.msra.mxu0 0.0
    %1771 = vmatprep.subr.mxu0 0.0
    %1772 = vmatpush1.msra.mxu0 0.0
    %1773 = vmatprep.subr.mxu0 0.0
    %1774 = vmatpush1.msra.mxu0 0.0
    %1775 = vmatprep.subr.mxu0 0.0
    %1776 = vmatpush1.msra.mxu0 0.0
    %1777 = vmatprep.subr.mxu0 0.0
    %1778 = vmatpush1.msra.mxu0 0.0
    %1779 = vmatprep.mubr.f32.mxu0 0.0
    %1780 = vmatmul.mubr.f32.gmra.mrb[0].mxu0 %v1703
    %v1781 = vpop.f32.mrb[0].mxu0
    %v1782 = vadd.f32 0.0, %v1781
    %v1783 = vpop.f32.mrb[0].mxu0
    %v1784 = vadd.f32 0.0, %v1783
    %1785 = vdwg.mxu0
    %1786 = vmatprep.subr.mxu0 %v387
    %1787 = vmatpush1.msra.mxu0 %v386
    %1788 = vmatprep.subr.mxu0 %v391
    %1789 = vmatpush1.msra.mxu0 %v390
    %1790 = vmatprep.subr.mxu0 %v395
    %1791 = vmatpush1.msra.mxu0 %v394
    %1792 = vmatprep.subr.mxu0 %v399
    %1793 = vmatpush1.msra.mxu0 %v398
    %1794 = vmatprep.subr.mxu0 %v403
    %1795 = vmatpush1.msra.mxu0 %v402
    %1796 = vmatprep.subr.mxu0 %v407
    %1797 = vmatpush1.msra.mxu0 %v406
    %1798 = vmatprep.subr.mxu0 %v411
    %1799 = vmatpush1.msra.mxu0 %v410
    %1800 = vmatprep.subr.mxu0 %v415
    %1801 = vmatpush1.msra.mxu0 %v414
    %1802 = vmatprep.subr.mxu0 %v419
    %1803 = vmatpush1.msra.mxu0 %v418
    %1804 = vmatprep.subr.mxu0 %v423
    %1805 = vmatpush1.msra.mxu0 %v422
    %1806 = vmatprep.subr.mxu0 %v427
    %1807 = vmatpush1.msra.mxu0 %v426
    %1808 = vmatprep.subr.mxu0 %v431
    %1809 = vmatpush1.msra.mxu0 %v430
    %1810 = vmatprep.subr.mxu0 %v435
    %1811 = vmatpush1.msra.mxu0 %v434
    %1812 = vmatprep.subr.mxu0 %v439
    %1813 = vmatpush1.msra.mxu0 %v438
    %1814 = vmatprep.subr.mxu0 %v443
    %1815 = vmatpush1.msra.mxu0 %v442
    %1816 = vmatprep.subr.mxu0 %v447
    %1817 = vmatpush1.msra.mxu0 %v446
    %1818 = vmatprep.subr.mxu0 0.0
    %1819 = vmatpush1.msra.mxu0 0.0
    %1820 = vmatprep.subr.mxu0 0.0
    %1821 = vmatpush1.msra.mxu0 0.0
    %1822 = vmatprep.subr.mxu0 0.0
    %1823 = vmatpush1.msra.mxu0 0.0
    %1824 = vmatprep.subr.mxu0 0.0
    %1825 = vmatpush1.msra.mxu0 0.0
    %1826 = vmatprep.subr.mxu0 0.0
    %1827 = vmatpush1.msra.mxu0 0.0
    %1828 = vmatprep.subr.mxu0 0.0
    %1829 = vmatpush1.msra.mxu0 0.0
    %1830 = vmatprep.subr.mxu0 0.0
    %1831 = vmatpush1.msra.mxu0 0.0
    %1832 = vmatprep.subr.mxu0 0.0
    %1833 = vmatpush1.msra.mxu0 0.0
    %1834 = vmatprep.subr.mxu0 0.0
    %1835 = vmatpush1.msra.mxu0 0.0
    %1836 = vmatprep.subr.mxu0 0.0
    %1837 = vmatpush1.msra.mxu0 0.0
    %1838 = vmatprep.subr.mxu0 0.0
    %1839 = vmatpush1.msra.mxu0 0.0
    %1840 = vmatprep.subr.mxu0 0.0
    %1841 = vmatpush1.msra.mxu0 0.0
    %1842 = vmatprep.subr.mxu0 0.0
    %1843 = vmatpush1.msra.mxu0 0.0
    %1844 = vmatprep.subr.mxu0 0.0
    %1845 = vmatpush1.msra.mxu0 0.0
    %1846 = vmatprep.subr.mxu0 0.0
    %1847 = vmatpush1.msra.mxu0 0.0
    %1848 = vmatprep.subr.mxu0 0.0
    %1849 = vmatpush1.msra.mxu0 0.0
    %1850 = vmatprep.mubr.f32.mxu0 0.0
    %1851 = vmatmul.mubr.f32.gmra.mrb[0].mxu0 %v1703
    %v1852 = vpop.f32.mrb[0].mxu0
    %v1853 = vadd.f32 0.0, %v1852
    %v1854 = vpop.f32.mrb[0].mxu0
    %v1855 = vadd.f32 0.0, %v1854
    %1856 = vdwg.mxu0
    %v1857 = vadd.f32 %v1711, %v1782
    %v1858 = vadd.f32 %v1712, %v1784
    %v1859 = vadd.f32 %v1713, %v1853
    %v1860 = vadd.f32 %v1714, %v1855
    %v1861 = vxor.u32 %v1857, 2147483648
    %v1862 = vxor.u32 %v1858, 2147483648
    %v1863 = vxor.u32 %v1859, 2147483648
    %v1864 = vmul.f32 %v1861, 1.442695
    %v1865 = vpow.pop %v1864
    %v1866 = vmul.f32 %v1862, 1.442695
    %v1867 = vpow.pop %v1866
    %v1868 = vmul.f32 %v1863, 1.442695
    %v1869 = vpow.pop %v1868
    %v1870 = vadd.f32 %v1865, 1.0
    %v1871 = vadd.f32 %v1867, 1.0
    %v1872 = vadd.f32 %v1869, 1.0
    %v1873 = vrcp.pop %v1870
    %v1874 = vmul.f32 1.0, %v1873
    %v1875 = vrcp.pop %v1871
    %v1876 = vmul.f32 1.0, %v1875
    %v1877 = vrcp.pop %v1872
    %v1878 = vmul.f32 1.0, %v1877
    %v1879 = vtanh.pop %v1860
    %v1880 = vmul.f32 %v1876, %v1701
    %v1881 = vmul.f32 %v1874, %v1879
    %v1882 = vadd.f32 %v1880, %v1881
    %v1883 = vtanh.pop %v1882
    %v1884 = vmul.f32 %v1878, %v1883
    %v1885 = vld [vmem:[#allocation6] sm:$0xff]
    %v1886 = vld [vmem:[#allocation6 + $0x8] sm:$0xff]
    %v1887 = vld [vmem:[#allocation6 + $0x10] sm:$0xff]
    %v1888 = vld [vmem:[#allocation6 + $0x18] sm:$0xff]
    %v1889 = vld [vmem:[#allocation6 + $0x20] sm:$0xff]
    %v1890 = vld [vmem:[#allocation6 + $0x28] sm:$0xff]
    %v1891 = vld [vmem:[#allocation6 + $0x30] sm:$0xff]
    %v1892 = vld [vmem:[#allocation6 + $0x38] sm:$0xff]
    %v1893 = vld [vmem:[#allocation6 + $0x40] sm:$0xff]
    %v1894 = vld [vmem:[#allocation6 + $0x48] sm:$0xff]
    %v1895 = vld [vmem:[#allocation6 + $0x50] sm:$0xff]
    %v1896 = vld [vmem:[#allocation6 + $0x58] sm:$0xff]
    %v1897 = vld [vmem:[#allocation6 + $0x60] sm:$0xff]
    %v1898 = vld [vmem:[#allocation6 + $0x68] sm:$0xff]
    %v1899 = vld [vmem:[#allocation6 + $0x70] sm:$0xff]
    %v1900 = vld [vmem:[#allocation6 + $0x78] sm:$0xff]
    %v1901 = vld [vmem:[%s5] sm:$0x1]
    %v1903 = vlaneseq
    %v1904 = vshrl.u32 %v1903, 7
    %v1905 = vsub.s32 0, %v1904
    %v1906 = vrot.slane %v1901, %v1905
    %1908 = vmatprep.subr.mxu0 0.0
    %1909 = vmatpush1.msra.mxu0 %v1885
    %1910 = vmatprep.subr.mxu0 0.0
    %1911 = vmatpush1.msra.mxu0 %v1886
    %1912 = vmatprep.subr.mxu0 0.0
    %1913 = vmatpush1.msra.mxu0 %v1887
    %1914 = vmatprep.subr.mxu0 0.0
    %1915 = vmatpush1.msra.mxu0 %v1888
    %1916 = vmatprep.subr.mxu0 0.0
    %1917 = vmatpush1.msra.mxu0 %v1889
    %1918 = vmatprep.subr.mxu0 0.0
    %1919 = vmatpush1.msra.mxu0 %v1890
    %1920 = vmatprep.subr.mxu0 0.0
    %1921 = vmatpush1.msra.mxu0 %v1891
    %1922 = vmatprep.subr.mxu0 0.0
    %1923 = vmatpush1.msra.mxu0 %v1892
    %1924 = vmatprep.subr.mxu0 0.0
    %1925 = vmatpush1.msra.mxu0 %v1893
    %1926 = vmatprep.subr.mxu0 0.0
    %1927 = vmatpush1.msra.mxu0 %v1894
    %1928 = vmatprep.subr.mxu0 0.0
    %1929 = vmatpush1.msra.mxu0 %v1895
    %1930 = vmatprep.subr.mxu0 0.0
    %1931 = vmatpush1.msra.mxu0 %v1896
    %1932 = vmatprep.subr.mxu0 0.0
    %1933 = vmatpush1.msra.mxu0 %v1897
    %1934 = vmatprep.subr.mxu0 0.0
    %1935 = vmatpush1.msra.mxu0 %v1898
    %1936 = vmatprep.subr.mxu0 0.0
    %1937 = vmatpush1.msra.mxu0 %v1899
    %1938 = vmatprep.subr.mxu0 0.0
    %1939 = vmatpush1.msra.mxu0 %v1900
    %1940 = vmatprep.subr.mxu0 0.0
    %1941 = vmatpush1.msra.mxu0 0.0
    %1942 = vmatprep.subr.mxu0 0.0
    %1943 = vmatpush1.msra.mxu0 0.0
    %1944 = vmatprep.subr.mxu0 0.0
    %1945 = vmatpush1.msra.mxu0 0.0
    %1946 = vmatprep.subr.mxu0 0.0
    %1947 = vmatpush1.msra.mxu0 0.0
    %1948 = vmatprep.subr.mxu0 0.0
    %1949 = vmatpush1.msra.mxu0 0.0
    %1950 = vmatprep.subr.mxu0 0.0
    %1951 = vmatpush1.msra.mxu0 0.0
    %1952 = vmatprep.subr.mxu0 0.0
    %1953 = vmatpush1.msra.mxu0 0.0
    %1954 = vmatprep.subr.mxu0 0.0
    %1955 = vmatpush1.msra.mxu0 0.0
    %1956 = vmatprep.subr.mxu0 0.0
    %1957 = vmatpush1.msra.mxu0 0.0
    %1958 = vmatprep.subr.mxu0 0.0
    %1959 = vmatpush1.msra.mxu0 0.0
    %1960 = vmatprep.subr.mxu0 0.0
    %1961 = vmatpush1.msra.mxu0 0.0
    %1962 = vmatprep.subr.mxu0 0.0
    %1963 = vmatpush1.msra.mxu0 0.0
    %1964 = vmatprep.subr.mxu0 0.0
    %1965 = vmatpush1.msra.mxu0 0.0
    %1966 = vmatprep.subr.mxu0 0.0
    %1967 = vmatpush1.msra.mxu0 0.0
    %1968 = vmatprep.subr.mxu0 0.0
    %1969 = vmatpush1.msra.mxu0 0.0
    %1970 = vmatprep.subr.mxu0 0.0
    %1971 = vmatpush1.msra.mxu0 0.0
    %1972 = vmatprep.mubr.f32.mxu0 0.0
    %1973 = vmatmul.mubr.f32.gmra.mrb[0].mxu0 %v1884
    %v1974 = vpop.f32.mrb[0].mxu0
    %v1975 = vadd.f32 %v1906, %v1974
    %v1976 = vpop.f32.mrb[0].mxu0
    %1977 = vdwg.mxu0
    %1978 = vmax.xlane.f32.xlu0 %v1975
    %v1979 = vpop.xlane.xlu0 %1978
    %v1980 = vsub.f32 %v1975, %v1979
    %v1981 = vmul.f32 %v1980, 1.442695
    %v1982 = vpow.pop %v1981
    %1983 = vadd.xlane.f32.xlu0 %v1982
    %v1984 = vpop.xlane.xlu0 %1983
    %v1985 = vrcp.pop %v1984
    %v1986 = vmul.f32 %v1982, %v1985
    %1987 = vst [vmem:[#allocation8] sm:$0xff] %v1986
    // Predicated region
    $region34: #{tpu_custom_call.1} parent=1 // pred_check
      _
    $region35: #{tpu_custom_call.1} parent=1 // pred_check_branch
      %1989 = sbr.rel (0) target = $region37
    $region36: #{tpu_custom_call.1} parent=1 // pred_region
      %s1991 = ssub.s32 128, 128
      %1992 = vsyncadd [#allocation5], %s1991
      %s1994 = sshll.u32 [#allocation8], 4
      %s1995 = int_to_ptr.vmem [resolvable:$true] %s1994
      %1997 = dma.vmem_to_hbm [thread:$0]  %s1995, 128, %s6, [#allocation5]
    $region37: #{tpu_custom_call.1} parent=1 // pred_fallthru
      _
    // Predicated region
    $region38: #{tpu_custom_call.1} parent=1 // pred_check
      _
    $region39: #{tpu_custom_call.1} parent=1 // pred_check_branch
      %1999 = sbr.rel (0) target = $region41
    $region40: #{tpu_custom_call.1} parent=1 // pred_region
      %2000 = dma.done [#allocation5], 128
    $region41: #{tpu_custom_call.1} parent=1 // pred_fallthru
      _
    %2001 = vsyncpa [#allocation4], 1
    %2002 = vsyncpa [#allocation7], 1
    %2003 = vsyncpa [#allocation5], 1

</llo_original>
